<compile_context>
chip_gen: v7x
topology: tpu7x:2x2x1
jax: 0.10.0
libtpu: 0.0.40
codegen_flags: <defaults>
</compile_context>

<pallas_src>
import math
import numpy as np
import jax
import jax.numpy as jnp
from jax.experimental import pallas as pl
from jax.experimental.pallas import tpu as pltpu

ACT_DTYPE = jnp.bfloat16          # intermediate activation storage dtype


def _round_up(x, m):
    return ((x + m - 1) // m) * m


# ----------------------------------------------------------------------------
# Pallas GEMM kernel:  out[g] = act( sum_k A[g] @ B[g]  [+ bias] [+ resid] )
# grid = (M tiles, N tiles, groups, K tiles).  The group axis is either parallel
# (grouped conv -> per-group outputs) or an extra reduction axis (dense conv whose
# input channels are stored group-major, "reduce_g").
# ----------------------------------------------------------------------------

def _make_gemm_kernel(act, has_scale, has_bias, has_resid, reduce_g):
    def kernel(*refs):
        it = iter(refs)
        a_ref = next(it)
        b_ref = next(it)
        scale_ref = next(it) if has_scale else None
        bias_ref = next(it) if has_bias else None
        resid_ref = next(it) if has_resid else None
        o_ref = next(it)
        acc_ref = next(it)

        g = pl.program_id(2)
        k = pl.program_id(3)
        ng = pl.num_programs(2)
        nk = pl.num_programs(3)
        if reduce_g:
            is_first = jnp.logical_and(k == 0, g == 0)
            is_last = jnp.logical_and(k == nk - 1, g == ng - 1)
        else:
            is_first = k == 0
            is_last = k == nk - 1

        @pl.when(is_first)
        def _():
            acc_ref[...] = jnp.zeros_like(acc_ref)

        a_val = a_ref[0]
        if has_scale:
            # fused attention gating of the A tile (per-row, per-group broadcast)
            a_val = (a_val.astype(jnp.float32) * scale_ref[0]).astype(jnp.bfloat16)
        acc_ref[...] += jnp.dot(a_val, b_ref[0], preferred_element_type=jnp.float32)

        @pl.when(is_last)
        def _():
            out = acc_ref[...]
            if has_bias:
                out = out + bias_ref[0].astype(jnp.float32)
            if has_resid:
                out = out + resid_ref[0].astype(jnp.float32)
            if act == "relu":
                out = jnp.maximum(out, 0.0)
            elif act == "sigmoid":
                out = jax.nn.sigmoid(out)
            elif act == "tanh":
                out = jnp.tanh(out)
            o_ref[0] = out.astype(o_ref.dtype)

    return kernel


_TM, _TN_MAX, _TK_MAX = 512, 512, 1024


def pallas_gemm(a, b, *, bias=None, resid=None, a_scale=None, act="none",
                reduce_g=False, out_dtype=ACT_DTYPE):
    """a: (Ga, M, K) with Ga in {1, G} (Ga=1 -> A shared by all groups),
       b: (G, K, Nc), bias: (1|G, 1, Nc), resid: (1|G, M, Nc), a_scale: (G, M, 1).
       reduce_g=False -> out (G, M, Nc) (per-group / dense GEMM)
       reduce_g=True  -> out (1, M, Nc) (accumulate over groups)."""
    G, K, Nc = b.shape
    Ga, M, Ka = a.shape
    assert Ka == K and Ga in (1, G)
    if G == 1:
        reduce_g = False
    Go = 1 if reduce_g else G

    a = a.astype(jnp.bfloat16)                 # bf16 MXU inputs, f32 accumulation
    b = b.astype(jnp.bfloat16)

    # Widen pathological (<8 lane) outputs to 128 lanes (dense vst); slice after.
    NP = Nc
    if Nc < 8:
        NP = 128
    elif Nc > _TN_MAX and Nc % _TN_MAX:
        NP = _round_up(Nc, _TN_MAX)
    if NP != Nc:
        b = jnp.pad(b, ((0, 0), (0, 0), (0, NP - Nc)))
        if bias is not None:
            bias = jnp.pad(bias, ((0, 0), (0, 0), (0, NP - Nc)))
        if resid is not None:
            resid = jnp.pad(resid, ((0, 0), (0, 0), (0, NP - Nc)))
    tn = NP if NP <= _TN_MAX else _TN_MAX

    # K is padded only when it must be split into tiles (never at the test sizes).
    if K <= _TK_MAX:
        tk, KP = K, K
    else:
        tk = _TK_MAX
        KP = _round_up(K, tk)
        if KP != K:
            a = jnp.pad(a, ((0, 0), (0, 0), (0, KP - K)))
            b = jnp.pad(b, ((0, 0), (0, KP - K), (0, 0)))

    tm = min(_TM, _round_up(M, 8))             # ragged last M tile handled by masking
    grid = (pl.cdiv(M, tm), NP // tn, G, KP // tk)

    args = [a, b]
    in_specs = [
        pl.BlockSpec((1, tm, tk),
                     (lambda i, j, g, k: (0, i, k)) if Ga == 1 else
                     (lambda i, j, g, k: (g, i, k))),
        pl.BlockSpec((1, tk, tn), lambda i, j, g, k: (g, k, j)),
    ]
    if a_scale is not None:
        args.append(a_scale.astype(jnp.float32))
        in_specs.append(pl.BlockSpec((1, tm, 1), lambda i, j, g, k: (g, i, 0)))
    if bias is not None:
        args.append(bias.astype(jnp.float32))
        in_specs.append(pl.BlockSpec(
            (1, 1, tn),
            (lambda i, j, g, k: (0, 0, j)) if bias.shape[0] == 1 else
            (lambda i, j, g, k: (g, 0, j))))
    if resid is not None:
        args.append(resid)
        in_specs.append(pl.BlockSpec(
            (1, tm, tn),
            (lambda i, j, g, k: (0, i, j)) if resid.shape[0] == 1 else
            (lambda i, j, g, k: (g, i, j))))

    out_map = ((lambda i, j, g, k: (0, i, j)) if Go == 1 else
               (lambda i, j, g, k: (g, i, j)))
    dims = ("parallel", "parallel",
            "arbitrary" if reduce_g else "parallel", "arbitrary")

    flops = int(2 * G * M * KP * NP)
    transc = int(Go * M * NP) if act in ("sigmoid", "tanh") else 0
    bytes_acc = int(a.size * 2 + b.size * 2
                    + Go * M * NP * jnp.dtype(out_dtype).itemsize
                    + (resid.size * resid.dtype.itemsize if resid is not None else 0))

    out = pl.pallas_call(
        _make_gemm_kernel(act, a_scale is not None, bias is not None,
                          resid is not None, reduce_g),
        out_shape=jax.ShapeDtypeStruct((Go, M, NP), out_dtype),
        grid=grid,
        in_specs=in_specs,
        out_specs=pl.BlockSpec((1, tm, tn), out_map),
        scratch_shapes=[pltpu.VMEM((tm, tn), jnp.float32)],
        compiler_params=pltpu.CompilerParams(dimension_semantics=dims),
        cost_estimate=pl.CostEstimate(flops=flops, transcendentals=transc,
                                      bytes_accessed=bytes_acc),
    )(*args)
    if NP != Nc:
        out = out[:, :, :Nc]
    return out


# ----------------------------------------------------------------------------
# Fused attention residual:  x_res = x - x*att  (= x * (1 - att)), att broadcast
# over the per-group channel dim inside the kernel (no jnp.repeat / x_att pass).
# ----------------------------------------------------------------------------

def _gate_kernel(x_ref, s_ref, o_ref):
    x = x_ref[0].astype(jnp.float32)
    o_ref[0] = (x * (1.0 - s_ref[0])).astype(o_ref.dtype)


def pallas_gate_residual(xw, att_g):
    """xw: (G,N,H,W,C), att_g: (G,N,H,W,1)  ->  (G,N,H,W,C) bf16."""
    G, N, H, W, C = xw.shape
    M = N * H * W
    x2 = xw.reshape(G, M, C).astype(ACT_DTYPE)
    s2 = att_g.reshape(G, M, 1).astype(jnp.float32)
    tm = min(_TM, _round_up(M, 8))
    out = pl.pallas_call(
        _gate_kernel,
        out_shape=jax.ShapeDtypeStruct((G, M, C), ACT_DTYPE),
        grid=(G, pl.cdiv(M, tm)),
        in_specs=[pl.BlockSpec((1, tm, C), lambda g, i: (g, i, 0)),
                  pl.BlockSpec((1, tm, 1), lambda g, i: (g, i, 0))],
        out_specs=pl.BlockSpec((1, tm, C), lambda g, i: (g, i, 0)),
        compiler_params=pltpu.CompilerParams(
            dimension_semantics=("parallel", "parallel")),
    )(x2, s2)
    return out.reshape(G, N, H, W, C)


# ----------------------------------------------------------------------------
# Conv glue (NHWC, group-major).  im2col column order = c*kh*kw + (ki*kw + kj),
# matching the PyTorch weight layout (Cout, Cin_g, kh, kw).
# TODO(synk): im2col still materializes the patch tensor in HBM for 3x3/5x5 convs;
# an implicit (kernel-position grid axis) im2col would cut that traffic further.
# ----------------------------------------------------------------------------

def _im2col(x5, kh, kw, stride, padding):
    G, N, H, W, C = x5.shape
    if padding:
        x5 = jnp.pad(x5, ((0, 0), (0, 0), (padding, padding),
                          (padding, padding), (0, 0)))
        H += 2 * padding
        W += 2 * padding
    Ho = (H - kh) // stride + 1
    Wo = (W - kw) // stride + 1
    if kh == 1 and kw == 1 and stride == 1:
        return x5.reshape(G, N * Ho * Wo, C), Ho, Wo
    cols = []
    for i in range(kh):
        for j in range(kw):
            cols.append(x5[:, :, i:i + stride * (Ho - 1) + 1:stride,
                                  j:j + stride * (Wo - 1) + 1:stride, :])
    p = jnp.stack(cols, axis=-1)                       # (G,N,Ho,Wo,C,kh*kw)
    return p.reshape(G, N * Ho * Wo, C * kh * kw), Ho, Wo


def conv2d(x5, weight, *, bias=None, stride=1, padding=0, groups=None, act="none",
           resid=None, out_dtype=ACT_DTYPE):
    """Grouped / dense conv.  x5: (Gx,N,H,W,Cin_g), weight: (G*og, Cin_g, kh, kw).
       Gx == G, or Gx == 1 with groups=G>1 (one input shared by every group)."""
    Gx, N, H, W, Cg = x5.shape
    Cout, Cin_g, kh, kw = weight.shape
    assert Cin_g == Cg
    G = Gx if groups is None else groups
    og = Cout // G
    patches, Ho, Wo = _im2col(x5, kh, kw, stride, padding)          # (Gx, M, Kg)
    M = N * Ho * Wo
    w3 = weight.reshape(G, og, Cin_g * kh * kw).transpose(0, 2, 1)  # (G, Kg, og)
    b3 = None if bias is None else bias.reshape(G, 1, og)
    r3 = None if resid is None else resid.reshape(G, M, og)
    out = pallas_gemm(patches, w3, bias=b3, resid=r3, act=act, out_dtype=out_dtype)
    return out.reshape(G, N, Ho, Wo, og)


def conv2d_reduce(x5, weight, *, bias=None, stride=1, padding=0, act="none",
                  resid=None, a_scale=None, out_dtype=ACT_DTYPE):
    """Dense conv over the flattened (wavelet-major) channels of a group-major input.
       x5: (G,N,H,W,Cg), weight: (Cout, G*Cg, kh, kw)  ->  (1, N, Ho, Wo, Cout)."""
    G, N, H, W, Cg = x5.shape
    Cout, Cin_tot, kh, kw = weight.shape
    assert Cin_tot == G * Cg
    assert a_scale is None or (kh == 1 and kw == 1 and stride == 1 and padding == 0)
    patches, Ho, Wo = _im2col(x5, kh, kw, stride, padding)          # (G, M, Cg*kh*kw)
    M = N * Ho * Wo
    w3 = (weight.reshape(Cout, G, Cg, kh, kw)
                .transpose(1, 2, 3, 4, 0)
                .reshape(G, Cg * kh * kw, Cout))
    b3 = None if bias is None else bias.reshape(1, 1, Cout)
    r3 = None if resid is None else resid.reshape(1, M, Cout)
    s3 = None if a_scale is None else a_scale.reshape(G, M, 1)
    out = pallas_gemm(patches, w3, bias=b3, resid=r3, a_scale=s3, act=act,
                      reduce_g=True, out_dtype=out_dtype)
    return out.reshape(1, N, Ho, Wo, Cout)


# ----------------------------------------------------------------------------
# Haar analysis/synthesis as VPU adds/subs (mem-bound; not an MXU matmul).
# TODO(synk): original 'model/wavelet.mat' rec2 filters unavailable; orthonormal
# 2x2 Haar filters substituted (deterministic, self-inverse).
# ----------------------------------------------------------------------------

def haar_dec(x5):
    """(1,N,H,W,C) -> wavelet-major group layout (4,N,H/2,W/2,C)."""
    _, N, H, W, C = x5.shape
    x = x5[0].reshape(N, H // 2, 2, W // 2, 2, C)
    p00, p01 = x[:, :, 0, :, 0, :], x[:, :, 0, :, 1, :]
    p10, p11 = x[:, :, 1, :, 0, :], x[:, :, 1, :, 1, :]
    return 0.5 * jnp.stack([p00 + p01 + p10 + p11,
                            p00 - p01 + p10 - p11,
                            p00 + p01 - p10 - p11,
                            p00 - p01 - p10 + p11], axis=0)


def haar_rec(xw):
    """(4,N,h,w,C) -> (1,N,2h,2w,C): grouped ConvTranspose2d(k=2,s=2) with Haar filters."""
    b0, b1, b2, b3 = xw[0], xw[1], xw[2], xw[3]
    o00 = b0 + b1 + b2 + b3
    o01 = b0 - b1 + b2 - b3
    o10 = b0 + b1 - b2 - b3
    o11 = b0 - b1 - b2 + b3
    N, h, w, C = b0.shape
    out = 0.5 * jnp.stack([jnp.stack([o00, o01], axis=3),
                           jnp.stack([o10, o11], axis=3)], axis=2)   # (N,h,2,w,2,C)
    return out.reshape(N, 2 * h, 2 * w, C)[None]


# ----------------------------------------------------------------------------
# Deterministic parameter init (synthetic weights; no checkpoint loading)
# ----------------------------------------------------------------------------

class ParamRNG:
    def __init__(self, seed=0):
        self.rng = np.random.default_rng(seed)

    def conv(self, cout, cin_g, kh, kw):
        fan = cin_g * kh * kw
        w = self.rng.standard_normal((cout, cin_g, kh, kw)).astype(np.float32) / math.sqrt(fan)
        return jnp.asarray(w)

    def bias(self, n):
        return jnp.asarray((self.rng.standard_normal((n,)) * 0.01).astype(np.float32))


# ----------------------------------------------------------------------------
# Modules (mirror the PyTorch classes; bn=False everywhere in the reference).
# Wavelet-domain tensors are group-major (4, N, H, W, C) = PyTorch's wavelet-major
# channel order after the `transpose=True` reshuffle, so the 4-channel attention
# map gates exactly the intended subband group (repeat_interleave semantics).
# ----------------------------------------------------------------------------

class BNResidualBlock:
    def __init__(self, prng, in_c, out_c, groups=1, last=True):
        self.groups, self.last = groups, last
        mid = out_c if out_c > in_c else in_c
        self.expand_w = prng.conv(out_c, in_c // groups, 1, 1) if in_c != out_c else None
        self.conv1_w = prng.conv(mid, in_c // groups, 3, 3)
        self.conv2_w = prng.conv(out_c, mid // groups, 3, 3)

    def __call__(self, x5):
        # x5: (groups, N, H, W, in_c // groups)
        idp = conv2d(x5, self.expand_w) if self.expand_w is not None else x5
        h = conv2d(x5, self.conv1_w, padding=1, act="relu")
        return conv2d(h, self.conv2_w, padding=1, resid=idp,
                      act=("none" if self.last else "relu"))


class WaveletPoolingP:
    def __init__(self, prng, in_c, out_c, downsample=True, scale=1, hdim=32):
        assert scale == 1, "only scale=1 is used by this model"
        nw = 4 ** scale
        self.nw, self.downsample = nw, downsample
        self.process = BNResidualBlock(prng, in_c * nw, out_c * nw, groups=nw)
        self.att0_w = prng.conv(hdim, in_c, 3, 3)
        # att1 first conv split into (att0-part | x-part); identical to conv-on-concat
        self.att1_w1a = prng.conv(hdim, hdim, 1, 1)
        self.att1_w1b = prng.conv(hdim, out_c * nw, 1, 1)
        self.att1_w2 = prng.conv(4, hdim, 1, 1)
        if downsample:
            self.pool_w = prng.conv(out_c, out_c * nw, 1, 1)
        else:
            assert in_c == out_c
            self.pool_w = None

    def __call__(self, x5, prior_att=None):
        # x5: (1, N, H, W, in_c)
        att0 = conv2d(x5, self.att0_w, stride=2, padding=1, act="relu")
        xw = haar_dec(x5)                                   # (4, N, h, w, in_c)
        xw = self.process(xw)                               # (4, N, h, w, out_c)
        if prior_att is None:
            t = conv2d(att0, self.att1_w1a, out_dtype=jnp.float32)
            hmid = conv2d_reduce(xw, self.att1_w1b, resid=t, act="relu")
            att = conv2d(hmid, self.att1_w2, act="sigmoid", out_dtype=jnp.float32)
        else:
            att = prior_att                                  # (1, N, h, w, 4)
        out_att = att
        att_g = jnp.moveaxis(att[0], -1, 0)[..., None]       # (4, N, h, w, 1) f32
        x_res = pallas_gate_residual(xw, att_g)              # x - x*att (bf16)
        if self.downsample:
            # x*att fused into the 1x1 pool GEMM (A-tile scale), accumulated over groups
            x_fwd = conv2d_reduce(xw, self.pool_w, a_scale=att_g)
        else:
            x_att = (xw.astype(jnp.float32) * att_g).astype(ACT_DTYPE)
            x_fwd = haar_rec(x_att)
        return x_fwd, x_res, out_att


class ResPoolP:
    def __init__(self, prng, in_c, out_c, downsample, num_layers=1, scale=1, reduction=8):
        self.pool = WaveletPoolingP(prng, in_c, out_c, downsample, scale=scale)
        self.res = [BNResidualBlock(prng, out_c, out_c) for _ in range(num_layers)]

    def __call__(self, x5, prior_att=None):
        x5, res, att = self.pool(x5, prior_att)
        for blk in self.res:
            x5 = blk(x5)
        return x5, res, att


class WaveletUpsampleP:
    def __init__(self, prng, in_c, out_c, upsample=True, scale=1, last=False):
        assert scale == 1
        nw = 4 ** scale
        self.nw, self.upsample = nw, upsample
        if upsample:
            self.up_w = prng.conv(in_c * nw, in_c, 1, 1)   # output channels wavelet-major
        else:
            assert in_c == out_c
            self.up_w = None
        self.process = BNResidualBlock(prng, in_c * nw, out_c * nw, groups=nw, last=last)
        # TODO(synk): `uncertainty` ConvTranspose2d head (last=True) is never used in
        # the reference forward(); omitted.

    def __call__(self, x5, res5):
        # x5: (1, N, h, w, in_c), res5: (4, N, h, w, in_c)
        if self.upsample:
            # fused: up(x) + res, one input tile broadcast to all 4 wavelet groups
            xu = conv2d(x5, self.up_w, groups=self.nw, resid=res5)
        else:
            xu = haar_dec(x5) + res5.astype(jnp.float32)
        xp = self.process(xu)                               # (4, N, h, w, out_c)
        return haar_rec(xp)                                 # (1, N, 2h, 2w, out_c)


class ResUpsampleP:
    def __init__(self, prng, in_c, out_c, upsample, num_layers=1, scale=1, last=True):
        self.res = [BNResidualBlock(prng, in_c, in_c) for _ in range(num_layers)]
        self.up = WaveletUpsampleP(prng, in_c, out_c, upsample, scale=scale, last=last)

    def __call__(self, x5, res5):
        for blk in self.res:
            x5 = blk(x5)
        return self.up(x5, res5)


class GeneratorP:
    def __init__(self, prng, ngf=64):
        self.down = [ResPoolP(prng, 3, ngf, True, 16, reduction=2),
                     ResPoolP(prng, ngf, ngf * 2, True, 16, reduction=4),
                     ResPoolP(prng, ngf * 2, ngf * 4, True, 16, reduction=8),
                     ResPoolP(prng, ngf * 4, ngf * 4, True, 16, reduction=8),
                     ResPoolP(prng, ngf * 4, ngf * 4, True, 16, reduction=8)]
        ups = [ResUpsampleP(prng, ngf, 3, True, 16, last=True),
               ResUpsampleP(prng, ngf * 2, ngf, True, 16),
               ResUpsampleP(prng, ngf * 4, ngf * 2, True, 16),
               ResUpsampleP(prng, ngf * 4, ngf * 4, True, 16),
               ResUpsampleP(prng, ngf * 4, ngf * 4, True, 16)]
        self.up = ups[::-1]

    def __call__(self, x):
        x5 = jnp.transpose(x, (0, 2, 3, 1))[None] * 2.0 - 1.0
        res, att = [], []
        for d in self.down:
            x5, r, a = d(x5)
            res.append(r)
            att.append(a)
        feats = []
        for u, r in zip(self.up, res[::-1]):
            feats.append(x5)
            x5 = u(x5, r)
        out = jnp.tanh(x5[0].astype(jnp.float32)) * 0.5 + 0.5
        return jnp.transpose(out, (0, 3, 1, 2)), att, feats


class DiscriminatorP:
    def __init__(self, prng, ndf=64):
        self.down = [ResPoolP(prng, 6, ndf, True, 1, reduction=2)] + \
                    [ResPoolP(prng, ndf, ndf, True, 1, reduction=2) for _ in range(4)]
        self.fc = [(prng.conv(1, ndf * 4, 5, 5), prng.bias(1)) for _ in range(5)]

    def __call__(self, x):                                   # x: NCHW float32
        x5 = jnp.transpose(x, (0, 2, 3, 1))[None] * 2.0 - 1.0
        outs = []
        for d, (fw, fb) in zip(self.down, self.fc):
            x5, r, _ = d(x5)
            # reference applies sigmoid after concatenating heads; fused per-head here
            # (elementwise-equivalent).  r is group-major -> reduce_g GEMM, no reshuffle.
            o = conv2d_reduce(r, fw, bias=fb, stride=2, padding=0,
                              act="sigmoid", out_dtype=jnp.float32)
            outs.append(o[0].reshape(o.shape[1], -1))
        return jnp.concatenate(outs, axis=1)


class WaveletModelP:
    def __init__(self, ngf=64, ndf=64, seed=0):
        prng = ParamRNG(seed)
        self.G = GeneratorP(prng, ngf)
        self.D = DiscriminatorP(prng, ndf)

    def forward(self, x):
        # reference WaveletModel.forward is `pass`
        return None

    def generate(self, x):
        return self.G(x)

    def discriminate(self, x):
        return jnp.mean(self.D(x))

    def get_l1_loss(self, x, y):
        return jnp.mean(jnp.abs(x - y))

    def get_ls_loss(self, x, y):
        return jnp.mean((x - y) ** 2)


# ----------------------------------------------------------------------------
if __name__ == "__main__":
    # The Discriminator's five 2x downsamplings + 5x5/stride-2 fc heads require the
    # deepest residual map (input / 2^5) to be >= 5, hence a 160x160 input.
    model = WaveletModelP(ngf=8, ndf=8, seed=0)

    key = jax.random.PRNGKey(0)
    x = jax.random.uniform(key, (1, 6, 160, 160), dtype=jnp.float32)

    # reference forward() is a no-op
    assert model.forward(x) is None

    # Discriminator path (ResPool -> WaveletPooling -> residual blocks -> fc heads)
    d = jax.block_until_ready(model.discriminate(x))
    assert d.shape == () and bool(jnp.isfinite(d)) and 0.0 < float(d) < 1.0

    # Exercise the Generator's upsample primitive (wavelet reconstruction path)
    wu = WaveletUpsampleP(ParamRNG(123), 8, 8, upsample=True, scale=1, last=False)
    xu = jax.random.normal(jax.random.fold_in(key, 1), (1, 1, 8, 8, 8), dtype=jnp.float32)
    ru = jax.random.normal(jax.random.fold_in(key, 2), (4, 1, 8, 8, 8), dtype=jnp.float32)
    yu = jax.block_until_ready(wu(xu, ru))
    assert yu.shape == (1, 1, 16, 16, 8)

    # Trivial loss heads
    loss = jax.block_until_ready(model.get_ls_loss(xu, 0.5 * xu))
    assert bool(jnp.isfinite(loss))

    print("KERNEL_OK")
</pallas_src>

<mosaic_0001>
module attributes {stable_mosaic.version = 11 : i64} {
  func.func @kernel(%arg0: i32, %arg1: i32, %arg2: i32, %arg3: i32, %arg4: memref<1x512x54xbf16, #tpu.memory_space<vmem>>, %arg5: memref<1x54x32xbf16, #tpu.memory_space<vmem>>, %arg6: memref<1x512x32xbf16, #tpu.memory_space<vmem>>, %arg7: memref<512x32xf32, #tpu.memory_space<vmem>>) attributes {dimension_semantics = [#tpu.dimension_semantics<parallel>, #tpu.dimension_semantics<parallel>, #tpu.dimension_semantics<parallel>, #tpu.dimension_semantics<arbitrary>], iteration_bounds = array<i64: 13, 1, 1, 1>, scalar_prefetch = 0 : i64, scratch_operands = 1 : i64, tpu.core_type = #tpu.core_type<tc>, window_params = [{transform_indices = @transform_0, window_bounds = array<i64: 1, 512, 54>}, {transform_indices = @transform_1, window_bounds = array<i64: 1, 54, 32>}, {transform_indices = @transform_2, window_bounds = array<i64: 1, 512, 32>}]} {
    %c0_i32 = arith.constant 0 : i32
    %0 = arith.cmpi eq, %arg3, %c0_i32 : i32
    %c0_i32_0 = arith.constant 0 : i32
    %1 = arith.cmpi eq, %arg3, %c0_i32_0 : i32
    %2 = arith.extui %0 : i1 to i32
    %c0_i32_1 = arith.constant 0 : i32
    %3 = arith.cmpi ne, %2, %c0_i32_1 : i32
    scf.if %3 {
      %cst_12 = arith.constant 0.000000e+00 : f32
      %14 = vector.broadcast %cst_12 : f32 to vector<512x32xf32>
      %c0_13 = arith.constant 0 : index
      %c0_14 = arith.constant 0 : index
      %15 = vector.load %arg7[%c0_13, %c0_14] : memref<512x32xf32, #tpu.memory_space<vmem>>, vector<512x32xf32>
      tpu.vector_store %arg7[%c0_13, %c0_14], %14 {strides = array<i32>} : memref<512x32xf32, #tpu.memory_space<vmem>>, vector<512x32xf32>,
    } else {
    }
    %c0 = arith.constant 0 : index
    %c0_2 = arith.constant 0 : index
    %c0_3 = arith.constant 0 : index
    %4 = vector.load %arg4[%c0, %c0_2, %c0_3] : memref<1x512x54xbf16, #tpu.memory_space<vmem>>, vector<1x512x54xbf16>
    %5 = vector.shape_cast %4 : vector<1x512x54xbf16> to vector<512x54xbf16>
    %c0_4 = arith.constant 0 : index
    %c0_5 = arith.constant 0 : index
    %6 = vector.load %arg7[%c0_4, %c0_5] : memref<512x32xf32, #tpu.memory_space<vmem>>, vector<512x32xf32>
    %c0_6 = arith.constant 0 : index
    %c0_7 = arith.constant 0 : index
    %c0_8 = arith.constant 0 : index
    %7 = vector.load %arg5[%c0_6, %c0_7, %c0_8] : memref<1x54x32xbf16, #tpu.memory_space<vmem>>, vector<1x54x32xbf16>
    %8 = vector.shape_cast %7 : vector<1x54x32xbf16> to vector<54x32xbf16>
    %cst = arith.constant dense<0.000000e+00> : vector<512x32xf32>
    %9 = tpu.matmul %5, %8, %cst {dimension_numbers = #tpu.dot_dimension_numbers<[1], [0], [0], [1], [0, 0, 1, 1], [], []>} : vector<512x54xbf16>, vector<54x32xbf16>, vector<512x32xf32> -> vector<512x32xf32>
    %10 = arith.addf %6, %9 : vector<512x32xf32>
    %c0_9 = arith.constant 0 : index
    %c0_10 = arith.constant 0 : index
    %11 = vector.load %arg7[%c0_9, %c0_10] : memref<512x32xf32, #tpu.memory_space<vmem>>, vector<512x32xf32>
    tpu.vector_store %arg7[%c0_9, %c0_10], %10 {strides = array<i32>} : memref<512x32xf32, #tpu.memory_space<vmem>>, vector<512x32xf32>,
    %12 = arith.extui %1 : i1 to i32
    %c0_i32_11 = arith.constant 0 : i32
    %13 = arith.cmpi ne, %12, %c0_i32_11 : i32
    scf.if %13 {
      %c0_12 = arith.constant 0 : index
      %c0_13 = arith.constant 0 : index
      %14 = vector.load %arg7[%c0_12, %c0_13] : memref<512x32xf32, #tpu.memory_space<vmem>>, vector<512x32xf32>
      %cst_14 = arith.constant 0.000000e+00 : f32
      %15 = vector.broadcast %cst_14 : f32 to vector<512x32xf32>
      %16 = arith.maximumf %14, %15 : vector<512x32xf32>
      %17 = arith.truncf %16 : vector<512x32xf32> to vector<512x32xbf16>
      %c0_15 = arith.constant 0 : index
      %c0_16 = arith.constant 0 : index
      %c0_17 = arith.constant 0 : index
      %18 = vector.load %arg6[%c0_15, %c0_16, %c0_17] : memref<1x512x32xbf16, #tpu.memory_space<vmem>>, vector<1x512x32xbf16>
      %19 = vector.shape_cast %18 : vector<1x512x32xbf16> to vector<512x32xbf16>
      %20 = vector.shape_cast %17 : vector<512x32xbf16> to vector<1x512x32xbf16>
      tpu.vector_store %arg6[%c0_15, %c0_16, %c0_17], %20 {strides = array<i32>} : memref<1x512x32xbf16, #tpu.memory_space<vmem>>, vector<1x512x32xbf16>,
    } else {
    }
    return
  }
  func.func @transform_0(%arg0: i32, %arg1: i32, %arg2: i32, %arg3: i32) -> (i32, i32, i32) {
    %c0_i32 = arith.constant 0 : i32
    %c0_i32_0 = arith.constant 0 : i32
    return %c0_i32, %arg0, %arg3 : i32, i32, i32
  }
  func.func @transform_1(%arg0: i32, %arg1: i32, %arg2: i32, %arg3: i32) -> (i32, i32, i32) {
    %c0_i32 = arith.constant 0 : i32
    return %arg2, %arg3, %arg1 : i32, i32, i32
  }
  func.func @transform_2(%arg0: i32, %arg1: i32, %arg2: i32, %arg3: i32) -> (i32, i32, i32) {
    %c0_i32 = arith.constant 0 : i32
    %c0_i32_0 = arith.constant 0 : i32
    return %c0_i32, %arg0, %arg1 : i32, i32, i32
  }
}

</mosaic_0001>

<llo_original>
// kernel: tpu_custom_call.1
$region0: #{tpu_custom_call.1}
  #allocation0 [shape = 'u32[]', space=smem, size = 0x4, offset = 0x4, fixed_abs, tag = 'smem constant byte address 0x4 - core index']
  #allocation1 [shape = 'u32[144,128]{1,0:T(1,128)}', space=vmem, size = 0x12000, scoped, tag = 'internal scratch']
  #allocation2 [shape = 'f32[512,32]{1,0:T(8,128)}', space=vmem, size = 0x40000, scoped, tag = 'scratch operand']
  %s0 = inlined_call_operand.vmem [shape: bf16[1,6400,54], index: 0, kind: input, shape index: {}]
  %s1 = inlined_call_operand.vmem [shape: bf16[1,54,32], index: 1, kind: input, shape index: {}]
  %s2 = inlined_call_operand.vmem [shape: bf16[1,6400,32], index: 2, kind: output, shape index: {}]
  %s3 = sld [smem:[#allocation0]]
  $region93: #{tpu_custom_call.1} parent=0
    _
  %s5 = ssub.s32 1, %s3
  %s6 = scalar_select 0, %s5, %s3
  $region1: #{tpu_custom_call.1} parent=0
    #allocation3 [shape = 'u8[262144]{0}', space=vmem, size = 0x40000, scoped, tag = 'output window, operand 0']
    loop: start=0, step=1, limit=15
    $region2: #{tpu_custom_call.1} parent=1 // loop_pre_header
      _
    $region3: #{tpu_custom_call.1} parent=1 // loop_header
      %s8 = sphi 0, %s12
      %p9 = scmp.ge.s32.totalorder %s8, 15
      %s15 = sphi 0, %s41
      %s16 = sphi 0, %s37
      %s17 = sphi 0, %s33
      %s18 = sphi 0, %s29
      %s19 = sphi 0, %s15
      %s20 = sphi 0, %s16
      %s21 = sphi 0, %s17
      %s22 = sphi 0, %s18
      %s23 = sphi 0, %s19
      %s24 = sphi 0, %s20
      %s25 = sphi 0, %s21
      %s26 = sphi 0, %s22
      %s46 = sphi 0, %s48
      %s49 = sphi 0, %s46
      %s50 = sphi 0, %s49
      %s66 = sphi 0, %s50
      %s76 = sphi 0, %s78
      %s79 = sphi 0, %s76
      %s80 = sphi 0, %s79
      %s96 = sphi 0, %s80
      %s104 = sphi 0, %s106
      %s107 = sphi 0, %s104
      %s108 = sphi 0, %s107
      %s124 = sphi 0, %s108
    $region4: #{tpu_custom_call.1} parent=1 // loop_header_branch
      %11 = sbr.rel (%p9) target = $region8
    $region5: #{tpu_custom_call.1} parent=1 // loop_body
      %s13 = ssub.s32 %s8, 1
      %s14 = ssub.s32 %s8, 2
      %s27 = sadd.s32 1, %s18
      %p28 = scmp.ge.s32.totalorder %s27, 1
      %s29 = scalar_select %p28, 0, %s27
      %s30 = sadd.s32 1, %s17
      %s31 = scalar_select %p28, %s30, %s17
      %p32 = scmp.ge.s32.totalorder %s31, 1
      %s33 = scalar_select %p32, 0, %s31
      %s34 = sadd.s32 1, %s16
      %s35 = scalar_select %p32, %s34, %s16
      %p36 = scmp.ge.s32.totalorder %s35, 1
      %s37 = scalar_select %p36, 0, %s35
      %s38 = sadd.s32 1, %s15
      %s39 = scalar_select %p36, %s38, %s15
      %p40 = scmp.ge.s32.totalorder %s39, 13
      %s41 = scalar_select %p40, 0, %s39
      %s42 = ssub.s32 %s15, %s41
      %s43 = ssub.s32 %s18, %s29
      %s44 = sor.u32 %s42, %s43
      %p45 = scmp.eq.s32.totalorder %s44, 0
      %s47 = sadd.s32 %s46, 1
      %s48 = scalar_select %p45, %s46, %s47
      %p51 = pneg %p45
      %p52 = scmp.eq.s32.totalorder %s8, 12
      %p53 = por %p51, %p52
      %p54 = scmp.ne.s32.totalorder %s46, %s49
      %p55 = scmp.eq.s32.totalorder %s8, 0
      %p56 = por %p54, %p55
      %p57 = scmp.ne.s32.totalorder %s46, %s49
      %p58 = scmp.eq.s32.totalorder %s13, 12
      %p59 = por %p57, %p58
      %p60 = scmp.ne.s32.totalorder %s49, %s50
      %p61 = scmp.eq.s32.totalorder %s13, 0
      %p62 = por %p60, %p61
      %p63 = scmp.ne.s32.totalorder %s49, %s50
      %p64 = scmp.eq.s32.totalorder %s14, 12
      %p65 = por %p63, %p64
      %p67 = scmp.ne.s32.totalorder %s50, %s66
      %p68 = scmp.eq.s32.totalorder %s14, 0
      %p69 = por %p67, %p68
      %s70 = ssub.s32 %s17, %s33
      %s71 = ssub.s32 %s18, %s29
      %s72 = sor.u32 %s70, %s71
      %s73 = ssub.s32 %s16, %s37
      %s74 = sor.u32 %s72, %s73
      %p75 = scmp.eq.s32.totalorder %s74, 0
      %s77 = sadd.s32 %s76, 1
      %s78 = scalar_select %p75, %s76, %s77
      %p81 = pneg %p75
      %p82 = scmp.eq.s32.totalorder %s8, 12
      %p83 = por %p81, %p82
      %p84 = scmp.ne.s32.totalorder %s76, %s79
      %p85 = scmp.eq.s32.totalorder %s8, 0
      %p86 = por %p84, %p85
      %p87 = scmp.ne.s32.totalorder %s76, %s79
      %p88 = scmp.eq.s32.totalorder %s13, 12
      %p89 = por %p87, %p88
      %p90 = scmp.ne.s32.totalorder %s79, %s80
      %p91 = scmp.eq.s32.totalorder %s13, 0
      %p92 = por %p90, %p91
      %p93 = scmp.ne.s32.totalorder %s79, %s80
      %p94 = scmp.eq.s32.totalorder %s14, 12
      %p95 = por %p93, %p94
      %p97 = scmp.ne.s32.totalorder %s80, %s96
      %p98 = scmp.eq.s32.totalorder %s14, 0
      %p99 = por %p97, %p98
      %s100 = ssub.s32 %s15, %s41
      %s101 = ssub.s32 %s16, %s37
      %s102 = sor.u32 %s100, %s101
      %p103 = scmp.eq.s32.totalorder %s102, 0
      %s105 = sadd.s32 %s104, 1
      %s106 = scalar_select %p103, %s104, %s105
      %p109 = pneg %p103
      %p110 = scmp.eq.s32.totalorder %s8, 12
      %p111 = por %p109, %p110
      %p112 = scmp.ne.s32.totalorder %s104, %s107
      %p113 = scmp.eq.s32.totalorder %s8, 0
      %p114 = por %p112, %p113
      %p115 = scmp.ne.s32.totalorder %s104, %s107
      %p116 = scmp.eq.s32.totalorder %s13, 12
      %p117 = por %p115, %p116
      %p118 = scmp.ne.s32.totalorder %s107, %s108
      %p119 = scmp.eq.s32.totalorder %s13, 0
      %p120 = por %p118, %p119
      %p121 = scmp.ne.s32.totalorder %s107, %s108
      %p122 = scmp.eq.s32.totalorder %s14, 12
      %p123 = por %p121, %p122
      %p125 = scmp.ne.s32.totalorder %s108, %s124
      %p126 = scmp.eq.s32.totalorder %s14, 0
      %p127 = por %p125, %p126
      %p128 = scmp.le.s32.totalorder 1, %s8
      %p129 = scmp.lt.s32.totalorder %s8, 14
      %p130 = pnand %p128, %p129
      %p131 = pneg %p130
      // Predicated region
      $region9: #{tpu_custom_call.1} parent=5 // pred_check
        _
      $region10: #{tpu_custom_call.1} parent=5 // pred_check_branch
        %133 = sbr.rel (%p130) target = $region12
      $region11: #{tpu_custom_call.1} parent=5 // pred_region
        %s134 = ssub.s32 %s8, 1
        // Predicated region
        $region13: #{tpu_custom_call.1} parent=11 // pred_check
          %p135 = pneg %p92
        $region14: #{tpu_custom_call.1} parent=11 // pred_check_branch
          %137 = sbr.rel (%p135) target = $region16
        $region15: #{tpu_custom_call.1} parent=11 // pred_region
          %s138 = smul.u32 7, %s22
          %p139 = scmp.lt.s32.totalorder %s21, 0
          %s140 = scalar_select %p139, %s21, 0
          %p141 = scmp.lt.s32.totalorder %s138, 6
          %s142 = scalar_select %p141, %s138, 6
          %p143 = scmp.lt.s32.totalorder %s20, 0
          %s144 = scalar_select %p143, %s20, 0
          %s145 = sadd.s32 %s144, %s142
          %s146 = smul.addr %s140, 7
          %s147 = sadd.s32 %s145, %s146
          %s148 = smul.addr %s147, 4
          %s149 = scalar_lea.vmem %s1, %s148
          %s150 = smul.u32 7, %s22
        $region16: #{tpu_custom_call.1} parent=11 // pred_fallthru
          _
      $region12: #{tpu_custom_call.1} parent=5 // pred_fallthru
        _
      %p151 = scmp.lt.s32.totalorder %s8, 13
      // Predicated region
      $region17: #{tpu_custom_call.1} parent=5 // pred_check
        %p152 = pneg %p151
      $region18: #{tpu_custom_call.1} parent=5 // pred_check_branch
        %154 = sbr.rel (%p152) target = $region20
      $region19: #{tpu_custom_call.1} parent=5 // pred_region
        // Predicated region
        $region21: #{tpu_custom_call.1} parent=19 // pred_check
          %p155 = pneg %p56
        $region22: #{tpu_custom_call.1} parent=19 // pred_check_branch
          %157 = sbr.rel (%p155) target = $region24
        $region23: #{tpu_custom_call.1} parent=19 // pred_region
          %s158 = smul.u32 64, %s15
          %s159 = ssub.s32 800, %s158
          %p160 = scmp.lt.s32.totalorder %s159, 64
          %s161 = scalar_select %p160, %s159, 64
          %s162 = smul.u32 64, %s161
          %p163 = scmp.lt.s32.totalorder %s158, 799
          %s164 = scalar_select %p163, %s158, 799
          %p165 = scmp.lt.s32.totalorder %s18, 0
          %s166 = scalar_select %p165, %s18, 0
          %s167 = sadd.s32 %s166, %s164
          %s168 = smul.addr %s167, 4
          %s169 = scalar_lea.vmem %s0, %s168
          %s170 = smul.u32 64, %s15
          %s171 = ssub.s32 800, %s170
          %p172 = scmp.lt.s32.totalorder %s171, 64
          %s173 = scalar_select %p172, %s171, 64
          %s174 = smul.u32 64, %s173
        $region24: #{tpu_custom_call.1} parent=19 // pred_fallthru
          _
      $region20: #{tpu_custom_call.1} parent=5 // pred_fallthru
        _
      %p175 = scmp.le.s32.totalorder 1, %s8
      %p176 = scmp.lt.s32.totalorder %s8, 14
      %p177 = pnand %p175, %p176
      %p178 = pneg %p177
      // Predicated region
      $region25: #{tpu_custom_call.1} parent=5 // pred_check
        _
      $region26: #{tpu_custom_call.1} parent=5 // pred_check_branch
        %180 = sbr.rel (%p177) target = $region28
      $region27: #{tpu_custom_call.1} parent=5 // pred_region
        %s181 = ssub.s32 %s8, 1
        %s182 = smul.u32 64, %s19
        %s183 = ssub.s32 800, %s182
        %p184 = scmp.lt.s32.totalorder %s183, 64
        %s185 = scalar_select %p184, %s183, 64
        %s186 = smul.u32 64, %s185
        %p187 = scmp.lt.s32.totalorder %s182, 799
        %s188 = scalar_select %p187, %s182, 799
        %p189 = scmp.lt.s32.totalorder %s22, 0
        %s190 = scalar_select %p189, %s22, 0
        %s191 = sadd.s32 %s190, %s188
        %s192 = smul.addr %s191, 4
        %s193 = scalar_lea.vmem %s0, %s192
        %p194 = pneg %p62
        %p195 = pneg %p59
        %s196 = smul.u32 7, %s22
        %p197 = scmp.lt.s32.totalorder %s21, 0
        %s198 = scalar_select %p197, %s21, 0
        %p199 = scmp.lt.s32.totalorder %s196, 6
        %s200 = scalar_select %p199, %s196, 6
        %p201 = scmp.lt.s32.totalorder %s20, 0
        %s202 = scalar_select %p201, %s20, 0
        %s203 = sadd.s32 %s202, %s200
        %s204 = smul.addr %s198, 7
        %s205 = sadd.s32 %s203, %s204
        %s206 = smul.addr %s205, 4
        %s207 = scalar_lea.vmem %s1, %s206
        %p208 = pneg %p92
        %p209 = pneg %p89
        %p210 = pneg %p120
        %p211 = pneg %p117
        %s212 = sand.u32 %s107, 1
        %s213 = sand.u32 %s107, 1
        %s214 = smul.addr %s213, 256
        %s215 = scalar_lea.vmem [#allocation3], %s214
        %s216 = smul.u32 64, %s19
        %s217 = ssub.s32 800, %s216
        %p218 = scmp.lt.s32.totalorder %s217, 64
        %s219 = scalar_select %p218, %s217, 64
        %s220 = smul.u32 64, %s219
        %p221 = scmp.lt.s32.totalorder %s216, 799
        %s222 = scalar_select %p221, %s216, 799
        %p223 = scmp.lt.s32.totalorder %s22, 0
        %s224 = scalar_select %p223, %s22, 0
        %s225 = sadd.s32 %s224, %s222
        %s226 = smul.addr %s225, 4
        %s227 = scalar_lea.vmem %s0, %s226
        %s228 = smul.u32 64, %s19
        %s229 = ssub.s32 800, %s228
        %p230 = scmp.lt.s32.totalorder %s229, 64
        %s231 = scalar_select %p230, %s229, 64
        %s232 = smul.u32 64, %s231
        %s233 = smul.u32 7, %s22
        %p234 = scmp.lt.s32.totalorder %s21, 0
        %s235 = scalar_select %p234, %s21, 0
        %p236 = scmp.lt.s32.totalorder %s233, 6
        %s237 = scalar_select %p236, %s233, 6
        %p238 = scmp.lt.s32.totalorder %s20, 0
        %s239 = scalar_select %p238, %s20, 0
        %s240 = sadd.s32 %s239, %s237
        %s241 = smul.addr %s235, 7
        %s242 = sadd.s32 %s240, %s241
        %s243 = smul.addr %s242, 4
        %s244 = scalar_lea.vmem %s1, %s243
        %s245 = smul.u32 7, %s22
        %s246 = smul.u32 64, %s19
        %s247 = ssub.s32 800, %s246
        %p248 = scmp.lt.s32.totalorder %s247, 64
        %s249 = scalar_select %p248, %s247, 64
        %s250 = smul.u32 64, %s249
        %p252 = scmp.eq.s32.totalorder %s22, 0
        // Predicated region
        $region29: #{tpu_custom_call.1} parent=27 // pred_check
          %p253 = pneg %p252
        $region30: #{tpu_custom_call.1} parent=27 // pred_check_branch
          %255 = sbr.rel (%p253) target = $region32
        $region31: #{tpu_custom_call.1} parent=27 // pred_region
          %vm256 = vcmask 261120
          %257 = vst.msk [vmem:[#allocation2] sm:$0xff] %vm256, 0.0
          %258 = vst.msk [vmem:[#allocation2 + $0x8] sm:$0xff] %vm256, 0.0
          %259 = vst.msk [vmem:[#allocation2 + $0x10] sm:$0xff] %vm256, 0.0
          %260 = vst.msk [vmem:[#allocation2 + $0x18] sm:$0xff] %vm256, 0.0
          %261 = vst.msk [vmem:[#allocation2 + $0x20] sm:$0xff] %vm256, 0.0
          %262 = vst.msk [vmem:[#allocation2 + $0x28] sm:$0xff] %vm256, 0.0
          %263 = vst.msk [vmem:[#allocation2 + $0x30] sm:$0xff] %vm256, 0.0
          %264 = vst.msk [vmem:[#allocation2 + $0x38] sm:$0xff] %vm256, 0.0
          %265 = vst.msk [vmem:[#allocation2 + $0x40] sm:$0xff] %vm256, 0.0
          %266 = vst.msk [vmem:[#allocation2 + $0x48] sm:$0xff] %vm256, 0.0
          %267 = vst.msk [vmem:[#allocation2 + $0x50] sm:$0xff] %vm256, 0.0
          %268 = vst.msk [vmem:[#allocation2 + $0x58] sm:$0xff] %vm256, 0.0
          %269 = vst.msk [vmem:[#allocation2 + $0x60] sm:$0xff] %vm256, 0.0
          %270 = vst.msk [vmem:[#allocation2 + $0x68] sm:$0xff] %vm256, 0.0
          %271 = vst.msk [vmem:[#allocation2 + $0x70] sm:$0xff] %vm256, 0.0
          %272 = vst.msk [vmem:[#allocation2 + $0x78] sm:$0xff] %vm256, 0.0
          %273 = vst.msk [vmem:[#allocation2 + $0x80] sm:$0xff] %vm256, 0.0
          %274 = vst.msk [vmem:[#allocation2 + $0x88] sm:$0xff] %vm256, 0.0
          %275 = vst.msk [vmem:[#allocation2 + $0x90] sm:$0xff] %vm256, 0.0
          %276 = vst.msk [vmem:[#allocation2 + $0x98] sm:$0xff] %vm256, 0.0
          %277 = vst.msk [vmem:[#allocation2 + $0xa0] sm:$0xff] %vm256, 0.0
          %278 = vst.msk [vmem:[#allocation2 + $0xa8] sm:$0xff] %vm256, 0.0
          %279 = vst.msk [vmem:[#allocation2 + $0xb0] sm:$0xff] %vm256, 0.0
          %280 = vst.msk [vmem:[#allocation2 + $0xb8] sm:$0xff] %vm256, 0.0
          %281 = vst.msk [vmem:[#allocation2 + $0xc0] sm:$0xff] %vm256, 0.0
          %282 = vst.msk [vmem:[#allocation2 + $0xc8] sm:$0xff] %vm256, 0.0
          %283 = vst.msk [vmem:[#allocation2 + $0xd0] sm:$0xff] %vm256, 0.0
          %284 = vst.msk [vmem:[#allocation2 + $0xd8] sm:$0xff] %vm256, 0.0
          %285 = vst.msk [vmem:[#allocation2 + $0xe0] sm:$0xff] %vm256, 0.0
          %286 = vst.msk [vmem:[#allocation2 + $0xe8] sm:$0xff] %vm256, 0.0
          %287 = vst.msk [vmem:[#allocation2 + $0xf0] sm:$0xff] %vm256, 0.0
          %288 = vst.msk [vmem:[#allocation2 + $0xf8] sm:$0xff] %vm256, 0.0
          %289 = vst.msk [vmem:[#allocation2 + $0x100] sm:$0xff] %vm256, 0.0
          %290 = vst.msk [vmem:[#allocation2 + $0x108] sm:$0xff] %vm256, 0.0
          %291 = vst.msk [vmem:[#allocation2 + $0x110] sm:$0xff] %vm256, 0.0
          %292 = vst.msk [vmem:[#allocation2 + $0x118] sm:$0xff] %vm256, 0.0
          %293 = vst.msk [vmem:[#allocation2 + $0x120] sm:$0xff] %vm256, 0.0
          %294 = vst.msk [vmem:[#allocation2 + $0x128] sm:$0xff] %vm256, 0.0
          %295 = vst.msk [vmem:[#allocation2 + $0x130] sm:$0xff] %vm256, 0.0
          %296 = vst.msk [vmem:[#allocation2 + $0x138] sm:$0xff] %vm256, 0.0
          %297 = vst.msk [vmem:[#allocation2 + $0x140] sm:$0xff] %vm256, 0.0
          %298 = vst.msk [vmem:[#allocation2 + $0x148] sm:$0xff] %vm256, 0.0
          %299 = vst.msk [vmem:[#allocation2 + $0x150] sm:$0xff] %vm256, 0.0
          %300 = vst.msk [vmem:[#allocation2 + $0x158] sm:$0xff] %vm256, 0.0
          %301 = vst.msk [vmem:[#allocation2 + $0x160] sm:$0xff] %vm256, 0.0
          %302 = vst.msk [vmem:[#allocation2 + $0x168] sm:$0xff] %vm256, 0.0
          %303 = vst.msk [vmem:[#allocation2 + $0x170] sm:$0xff] %vm256, 0.0
          %304 = vst.msk [vmem:[#allocation2 + $0x178] sm:$0xff] %vm256, 0.0
          %305 = vst.msk [vmem:[#allocation2 + $0x180] sm:$0xff] %vm256, 0.0
          %306 = vst.msk [vmem:[#allocation2 + $0x188] sm:$0xff] %vm256, 0.0
          %307 = vst.msk [vmem:[#allocation2 + $0x190] sm:$0xff] %vm256, 0.0
          %308 = vst.msk [vmem:[#allocation2 + $0x198] sm:$0xff] %vm256, 0.0
          %309 = vst.msk [vmem:[#allocation2 + $0x1a0] sm:$0xff] %vm256, 0.0
          %310 = vst.msk [vmem:[#allocation2 + $0x1a8] sm:$0xff] %vm256, 0.0
          %311 = vst.msk [vmem:[#allocation2 + $0x1b0] sm:$0xff] %vm256, 0.0
          %312 = vst.msk [vmem:[#allocation2 + $0x1b8] sm:$0xff] %vm256, 0.0
          %313 = vst.msk [vmem:[#allocation2 + $0x1c0] sm:$0xff] %vm256, 0.0
          %314 = vst.msk [vmem:[#allocation2 + $0x1c8] sm:$0xff] %vm256, 0.0
          %315 = vst.msk [vmem:[#allocation2 + $0x1d0] sm:$0xff] %vm256, 0.0
          %316 = vst.msk [vmem:[#allocation2 + $0x1d8] sm:$0xff] %vm256, 0.0
          %317 = vst.msk [vmem:[#allocation2 + $0x1e0] sm:$0xff] %vm256, 0.0
          %318 = vst.msk [vmem:[#allocation2 + $0x1e8] sm:$0xff] %vm256, 0.0
          %319 = vst.msk [vmem:[#allocation2 + $0x1f0] sm:$0xff] %vm256, 0.0
          %320 = vst.msk [vmem:[#allocation2 + $0x1f8] sm:$0xff] %vm256, 0.0
        $region32: #{tpu_custom_call.1} parent=27 // pred_fallthru
          _
        %v321 = vld [vmem:[%s227] sm:$0xf]
        %v322 = vld [vmem:[%s227 + $0x4] sm:$0xf]
        %v323 = vld [vmem:[%s227 + $0x8] sm:$0xf]
        %v324 = vld [vmem:[%s227 + $0xc] sm:$0xf]
        %v325 = vld [vmem:[%s227 + $0x10] sm:$0xf]
        %v326 = vld [vmem:[%s227 + $0x14] sm:$0xf]
        %v327 = vld [vmem:[%s227 + $0x18] sm:$0xf]
        %v328 = vld [vmem:[%s227 + $0x1c] sm:$0xf]
        %v329 = vld [vmem:[%s227 + $0x20] sm:$0xf]
        %v330 = vld [vmem:[%s227 + $0x24] sm:$0xf]
        %v331 = vld [vmem:[%s227 + $0x28] sm:$0xf]
        %v332 = vld [vmem:[%s227 + $0x2c] sm:$0xf]
        %v333 = vld [vmem:[%s227 + $0x30] sm:$0xf]
        %v334 = vld [vmem:[%s227 + $0x34] sm:$0xf]
        %v335 = vld [vmem:[%s227 + $0x38] sm:$0xf]
        %v336 = vld [vmem:[%s227 + $0x3c] sm:$0xf]
        %v337 = vld [vmem:[%s227 + $0x40] sm:$0xf]
        %v338 = vld [vmem:[%s227 + $0x44] sm:$0xf]
        %v339 = vld [vmem:[%s227 + $0x48] sm:$0xf]
        %v340 = vld [vmem:[%s227 + $0x4c] sm:$0xf]
        %v341 = vld [vmem:[%s227 + $0x50] sm:$0xf]
        %v342 = vld [vmem:[%s227 + $0x54] sm:$0xf]
        %v343 = vld [vmem:[%s227 + $0x58] sm:$0xf]
        %v344 = vld [vmem:[%s227 + $0x5c] sm:$0xf]
        %v345 = vld [vmem:[%s227 + $0x60] sm:$0xf]
        %v346 = vld [vmem:[%s227 + $0x64] sm:$0xf]
        %v347 = vld [vmem:[%s227 + $0x68] sm:$0xf]
        %v348 = vld [vmem:[%s227 + $0x6c] sm:$0xf]
        %v349 = vld [vmem:[%s227 + $0x70] sm:$0xf]
        %v350 = vld [vmem:[%s227 + $0x74] sm:$0xf]
        %v351 = vld [vmem:[%s227 + $0x78] sm:$0xf]
        %v352 = vld [vmem:[%s227 + $0x7c] sm:$0xf]
        %v353 = vld [vmem:[%s227 + $0x80] sm:$0xf]
        %v354 = vld [vmem:[%s227 + $0x84] sm:$0xf]
        %v355 = vld [vmem:[%s227 + $0x88] sm:$0xf]
        %v356 = vld [vmem:[%s227 + $0x8c] sm:$0xf]
        %v357 = vld [vmem:[%s227 + $0x90] sm:$0xf]
        %v358 = vld [vmem:[%s227 + $0x94] sm:$0xf]
        %v359 = vld [vmem:[%s227 + $0x98] sm:$0xf]
        %v360 = vld [vmem:[%s227 + $0x9c] sm:$0xf]
        %v361 = vld [vmem:[%s227 + $0xa0] sm:$0xf]
        %v362 = vld [vmem:[%s227 + $0xa4] sm:$0xf]
        %v363 = vld [vmem:[%s227 + $0xa8] sm:$0xf]
        %v364 = vld [vmem:[%s227 + $0xac] sm:$0xf]
        %v365 = vld [vmem:[%s227 + $0xb0] sm:$0xf]
        %v366 = vld [vmem:[%s227 + $0xb4] sm:$0xf]
        %v367 = vld [vmem:[%s227 + $0xb8] sm:$0xf]
        %v368 = vld [vmem:[%s227 + $0xbc] sm:$0xf]
        %v369 = vld [vmem:[%s227 + $0xc0] sm:$0xf]
        %v370 = vld [vmem:[%s227 + $0xc4] sm:$0xf]
        %v371 = vld [vmem:[%s227 + $0xc8] sm:$0xf]
        %v372 = vld [vmem:[%s227 + $0xcc] sm:$0xf]
        %v373 = vld [vmem:[%s227 + $0xd0] sm:$0xf]
        %v374 = vld [vmem:[%s227 + $0xd4] sm:$0xf]
        %v375 = vld [vmem:[%s227 + $0xd8] sm:$0xf]
        %v376 = vld [vmem:[%s227 + $0xdc] sm:$0xf]
        %v377 = vld [vmem:[%s227 + $0xe0] sm:$0xf]
        %v378 = vld [vmem:[%s227 + $0xe4] sm:$0xf]
        %v379 = vld [vmem:[%s227 + $0xe8] sm:$0xf]
        %v380 = vld [vmem:[%s227 + $0xec] sm:$0xf]
        %v381 = vld [vmem:[%s227 + $0xf0] sm:$0xf]
        %v382 = vld [vmem:[%s227 + $0xf4] sm:$0xf]
        %v383 = vld [vmem:[%s227 + $0xf8] sm:$0xf]
        %v384 = vld [vmem:[%s227 + $0xfc] sm:$0xf]
        %v385 = vld [vmem:[#allocation2] sm:$0xff]
        %v386 = vld [vmem:[#allocation2 + $0x8] sm:$0xff]
        %v387 = vld [vmem:[#allocation2 + $0x10] sm:$0xff]
        %v388 = vld [vmem:[#allocation2 + $0x18] sm:$0xff]
        %v389 = vld [vmem:[#allocation2 + $0x20] sm:$0xff]
        %v390 = vld [vmem:[#allocation2 + $0x28] sm:$0xff]
        %v391 = vld [vmem:[#allocation2 + $0x30] sm:$0xff]
        %v392 = vld [vmem:[#allocation2 + $0x38] sm:$0xff]
        %v393 = vld [vmem:[#allocation2 + $0x40] sm:$0xff]
        %v394 = vld [vmem:[#allocation2 + $0x48] sm:$0xff]
        %v395 = vld [vmem:[#allocation2 + $0x50] sm:$0xff]
        %v396 = vld [vmem:[#allocation2 + $0x58] sm:$0xff]
        %v397 = vld [vmem:[#allocation2 + $0x60] sm:$0xff]
        %v398 = vld [vmem:[#allocation2 + $0x68] sm:$0xff]
        %v399 = vld [vmem:[#allocation2 + $0x70] sm:$0xff]
        %v400 = vld [vmem:[#allocation2 + $0x78] sm:$0xff]
        %v401 = vld [vmem:[#allocation2 + $0x80] sm:$0xff]
        %v402 = vld [vmem:[#allocation2 + $0x88] sm:$0xff]
        %v403 = vld [vmem:[#allocation2 + $0x90] sm:$0xff]
        %v404 = vld [vmem:[#allocation2 + $0x98] sm:$0xff]
        %v405 = vld [vmem:[#allocation2 + $0xa0] sm:$0xff]
        %v406 = vld [vmem:[#allocation2 + $0xa8] sm:$0xff]
        %v407 = vld [vmem:[#allocation2 + $0xb0] sm:$0xff]
        %v408 = vld [vmem:[#allocation2 + $0xb8] sm:$0xff]
        %v409 = vld [vmem:[#allocation2 + $0xc0] sm:$0xff]
        %v410 = vld [vmem:[#allocation2 + $0xc8] sm:$0xff]
        %v411 = vld [vmem:[#allocation2 + $0xd0] sm:$0xff]
        %v412 = vld [vmem:[#allocation2 + $0xd8] sm:$0xff]
        %v413 = vld [vmem:[#allocation2 + $0xe0] sm:$0xff]
        %v414 = vld [vmem:[#allocation2 + $0xe8] sm:$0xff]
        %v415 = vld [vmem:[#allocation2 + $0xf0] sm:$0xff]
        %v416 = vld [vmem:[#allocation2 + $0xf8] sm:$0xff]
        %v417 = vld [vmem:[#allocation2 + $0x100] sm:$0xff]
        %v418 = vld [vmem:[#allocation2 + $0x108] sm:$0xff]
        %v419 = vld [vmem:[#allocation2 + $0x110] sm:$0xff]
        %v420 = vld [vmem:[#allocation2 + $0x118] sm:$0xff]
        %v421 = vld [vmem:[#allocation2 + $0x120] sm:$0xff]
        %v422 = vld [vmem:[#allocation2 + $0x128] sm:$0xff]
        %v423 = vld [vmem:[#allocation2 + $0x130] sm:$0xff]
        %v424 = vld [vmem:[#allocation2 + $0x138] sm:$0xff]
        %v425 = vld [vmem:[#allocation2 + $0x140] sm:$0xff]
        %v426 = vld [vmem:[#allocation2 + $0x148] sm:$0xff]
        %v427 = vld [vmem:[#allocation2 + $0x150] sm:$0xff]
        %v428 = vld [vmem:[#allocation2 + $0x158] sm:$0xff]
        %v429 = vld [vmem:[#allocation2 + $0x160] sm:$0xff]
        %v430 = vld [vmem:[#allocation2 + $0x168] sm:$0xff]
        %v431 = vld [vmem:[#allocation2 + $0x170] sm:$0xff]
        %v432 = vld [vmem:[#allocation2 + $0x178] sm:$0xff]
        %v433 = vld [vmem:[#allocation2 + $0x180] sm:$0xff]
        %v434 = vld [vmem:[#allocation2 + $0x188] sm:$0xff]
        %v435 = vld [vmem:[#allocation2 + $0x190] sm:$0xff]
        %v436 = vld [vmem:[#allocation2 + $0x198] sm:$0xff]
        %v437 = vld [vmem:[#allocation2 + $0x1a0] sm:$0xff]
        %v438 = vld [vmem:[#allocation2 + $0x1a8] sm:$0xff]
        %v439 = vld [vmem:[#allocation2 + $0x1b0] sm:$0xff]
        %v440 = vld [vmem:[#allocation2 + $0x1b8] sm:$0xff]
        %v441 = vld [vmem:[#allocation2 + $0x1c0] sm:$0xff]
        %v442 = vld [vmem:[#allocation2 + $0x1c8] sm:$0xff]
        %v443 = vld [vmem:[#allocation2 + $0x1d0] sm:$0xff]
        %v444 = vld [vmem:[#allocation2 + $0x1d8] sm:$0xff]
        %v445 = vld [vmem:[#allocation2 + $0x1e0] sm:$0xff]
        %v446 = vld [vmem:[#allocation2 + $0x1e8] sm:$0xff]
        %v447 = vld [vmem:[#allocation2 + $0x1f0] sm:$0xff]
        %v448 = vld [vmem:[#allocation2 + $0x1f8] sm:$0xff]
        %v449 = vld [vmem:[%s244] sm:$0xf]
        %v450 = vld [vmem:[%s244 + $0x4] sm:$0xf]
        %v451 = vld [vmem:[%s244 + $0x8] sm:$0xf]
        %v452 = vld [vmem:[%s244 + $0xc] sm:$0xf]
        %v453 = vld [vmem:[%s244 + $0x10] sm:$0xf]
        %v454 = vld [vmem:[%s244 + $0x14] sm:$0xf]
        %v455 = vld [vmem:[%s244 + $0x18] sm:$0x7]
        %v520 = vunpack.c.l.b16 %v321
        %v521 = vunpack.c.l.b16 %v322
        %v522 = vunpack.c.l.b16 %v323
        %v523 = vunpack.c.l.b16 %v324
        %v524 = vunpack.c.l.b16 %v325
        %v525 = vunpack.c.l.b16 %v326
        %v526 = vunpack.c.l.b16 %v327
        %v527 = vunpack.c.l.b16 %v328
        %v528 = vunpack.c.l.b16 %v329
        %v529 = vunpack.c.l.b16 %v330
        %v530 = vunpack.c.l.b16 %v331
        %v531 = vunpack.c.l.b16 %v332
        %v532 = vunpack.c.l.b16 %v333
        %v533 = vunpack.c.l.b16 %v334
        %v534 = vunpack.c.l.b16 %v335
        %v535 = vunpack.c.l.b16 %v336
        %v536 = vunpack.c.l.b16 %v337
        %v537 = vunpack.c.l.b16 %v338
        %v538 = vunpack.c.l.b16 %v339
        %v539 = vunpack.c.l.b16 %v340
        %v540 = vunpack.c.l.b16 %v341
        %v541 = vunpack.c.l.b16 %v342
        %v542 = vunpack.c.l.b16 %v343
        %v543 = vunpack.c.l.b16 %v344
        %v544 = vunpack.c.l.b16 %v345
        %v545 = vunpack.c.l.b16 %v346
        %v546 = vunpack.c.l.b16 %v347
        %v547 = vunpack.c.l.b16 %v348
        %v548 = vunpack.c.l.b16 %v349
        %v549 = vunpack.c.l.b16 %v350
        %v550 = vunpack.c.l.b16 %v351
        %v551 = vunpack.c.l.b16 %v352
        %v552 = vunpack.c.l.b16 %v353
        %v553 = vunpack.c.l.b16 %v354
        %v554 = vunpack.c.l.b16 %v355
        %v555 = vunpack.c.l.b16 %v356
        %v556 = vunpack.c.l.b16 %v357
        %v557 = vunpack.c.l.b16 %v358
        %v558 = vunpack.c.l.b16 %v359
        %v559 = vunpack.c.l.b16 %v360
        %v560 = vunpack.c.l.b16 %v361
        %v561 = vunpack.c.l.b16 %v362
        %v562 = vunpack.c.l.b16 %v363
        %v563 = vunpack.c.l.b16 %v364
        %v564 = vunpack.c.l.b16 %v365
        %v565 = vunpack.c.l.b16 %v366
        %v566 = vunpack.c.l.b16 %v367
        %v567 = vunpack.c.l.b16 %v368
        %v568 = vunpack.c.l.b16 %v369
        %v569 = vunpack.c.l.b16 %v370
        %v570 = vunpack.c.l.b16 %v371
        %v571 = vunpack.c.l.b16 %v372
        %v572 = vunpack.c.l.b16 %v373
        %v573 = vunpack.c.l.b16 %v374
        %v574 = vunpack.c.l.b16 %v375
        %v575 = vunpack.c.l.b16 %v376
        %v576 = vunpack.c.l.b16 %v377
        %v577 = vunpack.c.l.b16 %v378
        %v578 = vunpack.c.l.b16 %v379
        %v579 = vunpack.c.l.b16 %v380
        %v580 = vunpack.c.l.b16 %v381
        %v581 = vunpack.c.l.b16 %v382
        %v582 = vunpack.c.l.b16 %v383
        %v583 = vunpack.c.l.b16 %v384
        %v584 = vpack.c.b16 %v521, %v520
        %v585 = vpack.c.b16 %v523, %v522
        %v586 = vpack.c.b16 %v525, %v524
        %v587 = vpack.c.b16 %v527, %v526
        %v588 = vpack.c.b16 %v529, %v528
        %v589 = vpack.c.b16 %v531, %v530
        %v590 = vpack.c.b16 %v533, %v532
        %v591 = vpack.c.b16 %v535, %v534
        %v592 = vpack.c.b16 %v537, %v536
        %v593 = vpack.c.b16 %v539, %v538
        %v594 = vpack.c.b16 %v541, %v540
        %v595 = vpack.c.b16 %v543, %v542
        %v596 = vpack.c.b16 %v545, %v544
        %v597 = vpack.c.b16 %v547, %v546
        %v598 = vpack.c.b16 %v549, %v548
        %v599 = vpack.c.b16 %v551, %v550
        %v600 = vpack.c.b16 %v553, %v552
        %v601 = vpack.c.b16 %v555, %v554
        %v602 = vpack.c.b16 %v557, %v556
        %v603 = vpack.c.b16 %v559, %v558
        %v604 = vpack.c.b16 %v561, %v560
        %v605 = vpack.c.b16 %v563, %v562
        %v606 = vpack.c.b16 %v565, %v564
        %v607 = vpack.c.b16 %v567, %v566
        %v608 = vpack.c.b16 %v569, %v568
        %v609 = vpack.c.b16 %v571, %v570
        %v610 = vpack.c.b16 %v573, %v572
        %v611 = vpack.c.b16 %v575, %v574
        %v612 = vpack.c.b16 %v577, %v576
        %v613 = vpack.c.b16 %v579, %v578
        %v614 = vpack.c.b16 %v581, %v580
        %v615 = vpack.c.b16 %v583, %v582
        %v623 = vunpack.c.l.b16 %v449
        %v624 = vunpack.c.l.b16 %v450
        %v625 = vunpack.c.l.b16 %v451
        %v626 = vunpack.c.l.b16 %v452
        %v627 = vunpack.c.l.b16 %v453
        %v628 = vunpack.c.l.b16 %v454
        %v629 = vunpack.c.l.b16 %v455
        %v630 = vpack.c.b16 %v624, %v623
        %v631 = vpack.c.b16 %v626, %v625
        %v632 = vpack.c.b16 %v628, %v627
        %v633 = vpack.c.b16 %v629, %v629
        %vm637 = vcmask 441344
        %v639 = vsel %vm637, %v584, 0
        %v642 = vsel %vm637, %v585, 0
        %v645 = vsel %vm637, %v586, 0
        %v648 = vsel %vm637, %v587, 0
        %v651 = vsel %vm637, %v588, 0
        %v654 = vsel %vm637, %v589, 0
        %v657 = vsel %vm637, %v590, 0
        %v660 = vsel %vm637, %v591, 0
        %v663 = vsel %vm637, %v592, 0
        %v666 = vsel %vm637, %v593, 0
        %v669 = vsel %vm637, %v594, 0
        %v672 = vsel %vm637, %v595, 0
        %v675 = vsel %vm637, %v596, 0
        %v678 = vsel %vm637, %v597, 0
        %v681 = vsel %vm637, %v598, 0
        %v684 = vsel %vm637, %v599, 0
        %v687 = vsel %vm637, %v600, 0
        %v690 = vsel %vm637, %v601, 0
        %v693 = vsel %vm637, %v602, 0
        %v696 = vsel %vm637, %v603, 0
        %v699 = vsel %vm637, %v604, 0
        %v702 = vsel %vm637, %v605, 0
        %v705 = vsel %vm637, %v606, 0
        %v708 = vsel %vm637, %v607, 0
        %v711 = vsel %vm637, %v608, 0
        %v714 = vsel %vm637, %v609, 0
        %v717 = vsel %vm637, %v610, 0
        %v720 = vsel %vm637, %v611, 0
        %v723 = vsel %vm637, %v612, 0
        %v726 = vsel %vm637, %v613, 0
        %v729 = vsel %vm637, %v614, 0
        %v732 = vsel %vm637, %v615, 0
        %vm734 = vcmask 1042432
        %v736 = vsel %vm734, %v633, 0
        %738 = vmatprep.subr.bf16.mxu0 0
        %739 = vmatpush1.bf16.msra.mxu0 %v630
        %740 = vmatprep.subr.bf16.mxu0 0
        %741 = vmatpush1.bf16.msra.mxu0 %v631
        %742 = vmatprep.subr.bf16.mxu0 0
        %743 = vmatpush1.bf16.msra.mxu0 %v632
        %744 = vmatprep.subr.bf16.mxu0 0
        %745 = vmatpush1.bf16.msra.mxu0 %v736
        %746 = vmatprep.subr.bf16.mxu0 0
        %747 = vmatpush1.bf16.msra.mxu0 0
        %748 = vmatprep.subr.bf16.mxu0 0
        %749 = vmatpush1.bf16.msra.mxu0 0
        %750 = vmatprep.subr.bf16.mxu0 0
        %751 = vmatpush1.bf16.msra.mxu0 0
        %752 = vmatprep.subr.bf16.mxu0 0
        %753 = vmatpush1.bf16.msra.mxu0 0
        %754 = vmatprep.subr.bf16.mxu0 0
        %755 = vmatpush1.bf16.msra.mxu0 0
        %756 = vmatprep.subr.bf16.mxu0 0
        %757 = vmatpush1.bf16.msra.mxu0 0
        %758 = vmatprep.subr.bf16.mxu0 0
        %759 = vmatpush1.bf16.msra.mxu0 0
        %760 = vmatprep.subr.bf16.mxu0 0
        %761 = vmatpush1.bf16.msra.mxu0 0
        %762 = vmatprep.subr.bf16.mxu0 0
        %763 = vmatpush1.bf16.msra.mxu0 0
        %764 = vmatprep.subr.bf16.mxu0 0
        %765 = vmatpush1.bf16.msra.mxu0 0
        %766 = vmatprep.subr.bf16.mxu0 0
        %767 = vmatpush1.bf16.msra.mxu0 0
        %768 = vmatprep.subr.bf16.mxu0 0
        %769 = vmatpush1.bf16.msra.mxu0 0
        %770 = vmatprep.mubr.bf16.mxu0 0
        %771 = vmatmul.mubr.bf16.gmra.mrb[0].mxu0 %v639
        %v772 = vpop.f32.mrb[0].mxu0
        %v773 = vadd.f32 0.0, %v772
        %v774 = vpop.f32.mrb[0].mxu0
        %v775 = vpop.f32.mrb[0].mxu0
        %v776 = vadd.f32 0.0, %v775
        %v777 = vpop.f32.mrb[0].mxu0
        %778 = vmatprep.mubr.bf16.mxu0 0
        %779 = vmatmul.mubr.bf16.gmra.mrb[0].mxu0 %v642
        %v780 = vpop.f32.mrb[0].mxu0
        %v781 = vadd.f32 0.0, %v780
        %v782 = vpop.f32.mrb[0].mxu0
        %v783 = vpop.f32.mrb[0].mxu0
        %v784 = vadd.f32 0.0, %v783
        %v785 = vpop.f32.mrb[0].mxu0
        %786 = vmatprep.mubr.bf16.mxu0 0
        %787 = vmatmul.mubr.bf16.gmra.mrb[0].mxu0 %v645
        %v788 = vpop.f32.mrb[0].mxu0
        %v789 = vadd.f32 0.0, %v788
        %v790 = vpop.f32.mrb[0].mxu0
        %v791 = vpop.f32.mrb[0].mxu0
        %v792 = vadd.f32 0.0, %v791
        %v793 = vpop.f32.mrb[0].mxu0
        %794 = vmatprep.mubr.bf16.mxu0 0
        %795 = vmatmul.mubr.bf16.gmra.mrb[0].mxu0 %v648
        %v796 = vpop.f32.mrb[0].mxu0
        %v797 = vadd.f32 0.0, %v796
        %v798 = vpop.f32.mrb[0].mxu0
        %v799 = vpop.f32.mrb[0].mxu0
        %v800 = vadd.f32 0.0, %v799
        %v801 = vpop.f32.mrb[0].mxu0
        %802 = vmatprep.mubr.bf16.mxu0 0
        %803 = vmatmul.mubr.bf16.gmra.mrb[0].mxu0 %v651
        %v804 = vpop.f32.mrb[0].mxu0
        %v805 = vadd.f32 0.0, %v804
        %v806 = vpop.f32.mrb[0].mxu0
        %v807 = vpop.f32.mrb[0].mxu0
        %v808 = vadd.f32 0.0, %v807
        %v809 = vpop.f32.mrb[0].mxu0
        %810 = vmatprep.mubr.bf16.mxu0 0
        %811 = vmatmul.mubr.bf16.gmra.mrb[0].mxu0 %v654
        %v812 = vpop.f32.mrb[0].mxu0
        %v813 = vadd.f32 0.0, %v812
        %v814 = vpop.f32.mrb[0].mxu0
        %v815 = vpop.f32.mrb[0].mxu0
        %v816 = vadd.f32 0.0, %v815
        %v817 = vpop.f32.mrb[0].mxu0
        %818 = vmatprep.mubr.bf16.mxu0 0
        %819 = vmatmul.mubr.bf16.gmra.mrb[0].mxu0 %v657
        %v820 = vpop.f32.mrb[0].mxu0
        %v821 = vadd.f32 0.0, %v820
        %v822 = vpop.f32.mrb[0].mxu0
        %v823 = vpop.f32.mrb[0].mxu0
        %v824 = vadd.f32 0.0, %v823
        %v825 = vpop.f32.mrb[0].mxu0
        %826 = vmatprep.mubr.bf16.mxu0 0
        %827 = vmatmul.mubr.bf16.gmra.mrb[0].mxu0 %v660
        %v828 = vpop.f32.mrb[0].mxu0
        %v829 = vadd.f32 0.0, %v828
        %v830 = vpop.f32.mrb[0].mxu0
        %v831 = vpop.f32.mrb[0].mxu0
        %v832 = vadd.f32 0.0, %v831
        %v833 = vpop.f32.mrb[0].mxu0
        %834 = vmatprep.mubr.bf16.mxu0 0
        %835 = vmatmul.mubr.bf16.gmra.mrb[0].mxu0 %v663
        %v836 = vpop.f32.mrb[0].mxu0
        %v837 = vadd.f32 0.0, %v836
        %v838 = vpop.f32.mrb[0].mxu0
        %v839 = vpop.f32.mrb[0].mxu0
        %v840 = vadd.f32 0.0, %v839
        %v841 = vpop.f32.mrb[0].mxu0
        %842 = vmatprep.mubr.bf16.mxu0 0
        %843 = vmatmul.mubr.bf16.gmra.mrb[0].mxu0 %v666
        %v844 = vpop.f32.mrb[0].mxu0
        %v845 = vadd.f32 0.0, %v844
        %v846 = vpop.f32.mrb[0].mxu0
        %v847 = vpop.f32.mrb[0].mxu0
        %v848 = vadd.f32 0.0, %v847
        %v849 = vpop.f32.mrb[0].mxu0
        %850 = vmatprep.mubr.bf16.mxu0 0
        %851 = vmatmul.mubr.bf16.gmra.mrb[0].mxu0 %v669
        %v852 = vpop.f32.mrb[0].mxu0
        %v853 = vadd.f32 0.0, %v852
        %v854 = vpop.f32.mrb[0].mxu0
        %v855 = vpop.f32.mrb[0].mxu0
        %v856 = vadd.f32 0.0, %v855
        %v857 = vpop.f32.mrb[0].mxu0
        %858 = vmatprep.mubr.bf16.mxu0 0
        %859 = vmatmul.mubr.bf16.gmra.mrb[0].mxu0 %v672
        %v860 = vpop.f32.mrb[0].mxu0
        %v861 = vadd.f32 0.0, %v860
        %v862 = vpop.f32.mrb[0].mxu0
        %v863 = vpop.f32.mrb[0].mxu0
        %v864 = vadd.f32 0.0, %v863
        %v865 = vpop.f32.mrb[0].mxu0
        %866 = vmatprep.mubr.bf16.mxu0 0
        %867 = vmatmul.mubr.bf16.gmra.mrb[0].mxu0 %v675
        %v868 = vpop.f32.mrb[0].mxu0
        %v869 = vadd.f32 0.0, %v868
        %v870 = vpop.f32.mrb[0].mxu0
        %v871 = vpop.f32.mrb[0].mxu0
        %v872 = vadd.f32 0.0, %v871
        %v873 = vpop.f32.mrb[0].mxu0
        %874 = vmatprep.mubr.bf16.mxu0 0
        %875 = vmatmul.mubr.bf16.gmra.mrb[0].mxu0 %v678
        %v876 = vpop.f32.mrb[0].mxu0
        %v877 = vadd.f32 0.0, %v876
        %v878 = vpop.f32.mrb[0].mxu0
        %v879 = vpop.f32.mrb[0].mxu0
        %v880 = vadd.f32 0.0, %v879
        %v881 = vpop.f32.mrb[0].mxu0
        %882 = vmatprep.mubr.bf16.mxu0 0
        %883 = vmatmul.mubr.bf16.gmra.mrb[0].mxu0 %v681
        %v884 = vpop.f32.mrb[0].mxu0
        %v885 = vadd.f32 0.0, %v884
        %v886 = vpop.f32.mrb[0].mxu0
        %v887 = vpop.f32.mrb[0].mxu0
        %v888 = vadd.f32 0.0, %v887
        %v889 = vpop.f32.mrb[0].mxu0
        %890 = vmatprep.mubr.bf16.mxu0 0
        %891 = vmatmul.mubr.bf16.gmra.mrb[0].mxu0 %v684
        %v892 = vpop.f32.mrb[0].mxu0
        %v893 = vadd.f32 0.0, %v892
        %v894 = vpop.f32.mrb[0].mxu0
        %v895 = vpop.f32.mrb[0].mxu0
        %v896 = vadd.f32 0.0, %v895
        %v897 = vpop.f32.mrb[0].mxu0
        %898 = vmatprep.mubr.bf16.mxu0 0
        %899 = vmatmul.mubr.bf16.gmra.mrb[0].mxu0 %v687
        %v900 = vpop.f32.mrb[0].mxu0
        %v901 = vadd.f32 0.0, %v900
        %v902 = vpop.f32.mrb[0].mxu0
        %v903 = vpop.f32.mrb[0].mxu0
        %v904 = vadd.f32 0.0, %v903
        %v905 = vpop.f32.mrb[0].mxu0
        %906 = vmatprep.mubr.bf16.mxu0 0
        %907 = vmatmul.mubr.bf16.gmra.mrb[0].mxu0 %v690
        %v908 = vpop.f32.mrb[0].mxu0
        %v909 = vadd.f32 0.0, %v908
        %v910 = vpop.f32.mrb[0].mxu0
        %v911 = vpop.f32.mrb[0].mxu0
        %v912 = vadd.f32 0.0, %v911
        %v913 = vpop.f32.mrb[0].mxu0
        %914 = vmatprep.mubr.bf16.mxu0 0
        %915 = vmatmul.mubr.bf16.gmra.mrb[0].mxu0 %v693
        %v916 = vpop.f32.mrb[0].mxu0
        %v917 = vadd.f32 0.0, %v916
        %v918 = vpop.f32.mrb[0].mxu0
        %v919 = vpop.f32.mrb[0].mxu0
        %v920 = vadd.f32 0.0, %v919
        %v921 = vpop.f32.mrb[0].mxu0
        %922 = vmatprep.mubr.bf16.mxu0 0
        %923 = vmatmul.mubr.bf16.gmra.mrb[0].mxu0 %v696
        %v924 = vpop.f32.mrb[0].mxu0
        %v925 = vadd.f32 0.0, %v924
        %v926 = vpop.f32.mrb[0].mxu0
        %v927 = vpop.f32.mrb[0].mxu0
        %v928 = vadd.f32 0.0, %v927
        %v929 = vpop.f32.mrb[0].mxu0
        %930 = vmatprep.mubr.bf16.mxu0 0
        %931 = vmatmul.mubr.bf16.gmra.mrb[0].mxu0 %v699
        %v932 = vpop.f32.mrb[0].mxu0
        %v933 = vadd.f32 0.0, %v932
        %v934 = vpop.f32.mrb[0].mxu0
        %v935 = vpop.f32.mrb[0].mxu0
        %v936 = vadd.f32 0.0, %v935
        %v937 = vpop.f32.mrb[0].mxu0
        %938 = vmatprep.mubr.bf16.mxu0 0
        %939 = vmatmul.mubr.bf16.gmra.mrb[0].mxu0 %v702
        %v940 = vpop.f32.mrb[0].mxu0
        %v941 = vadd.f32 0.0, %v940
        %v942 = vpop.f32.mrb[0].mxu0
        %v943 = vpop.f32.mrb[0].mxu0
        %v944 = vadd.f32 0.0, %v943
        %v945 = vpop.f32.mrb[0].mxu0
        %946 = vmatprep.mubr.bf16.mxu0 0
        %947 = vmatmul.mubr.bf16.gmra.mrb[0].mxu0 %v705
        %v948 = vpop.f32.mrb[0].mxu0
        %v949 = vadd.f32 0.0, %v948
        %v950 = vpop.f32.mrb[0].mxu0
        %v951 = vpop.f32.mrb[0].mxu0
        %v952 = vadd.f32 0.0, %v951
        %v953 = vpop.f32.mrb[0].mxu0
        %954 = vmatprep.mubr.bf16.mxu0 0
        %955 = vmatmul.mubr.bf16.gmra.mrb[0].mxu0 %v708
        %v956 = vpop.f32.mrb[0].mxu0
        %v957 = vadd.f32 0.0, %v956
        %v958 = vpop.f32.mrb[0].mxu0
        %v959 = vpop.f32.mrb[0].mxu0
        %v960 = vadd.f32 0.0, %v959
        %v961 = vpop.f32.mrb[0].mxu0
        %962 = vmatprep.mubr.bf16.mxu0 0
        %963 = vmatmul.mubr.bf16.gmra.mrb[0].mxu0 %v711
        %v964 = vpop.f32.mrb[0].mxu0
        %v965 = vadd.f32 0.0, %v964
        %v966 = vpop.f32.mrb[0].mxu0
        %v967 = vpop.f32.mrb[0].mxu0
        %v968 = vadd.f32 0.0, %v967
        %v969 = vpop.f32.mrb[0].mxu0
        %970 = vmatprep.mubr.bf16.mxu0 0
        %971 = vmatmul.mubr.bf16.gmra.mrb[0].mxu0 %v714
        %v972 = vpop.f32.mrb[0].mxu0
        %v973 = vadd.f32 0.0, %v972
        %v974 = vpop.f32.mrb[0].mxu0
        %v975 = vpop.f32.mrb[0].mxu0
        %v976 = vadd.f32 0.0, %v975
        %v977 = vpop.f32.mrb[0].mxu0
        %978 = vmatprep.mubr.bf16.mxu0 0
        %979 = vmatmul.mubr.bf16.gmra.mrb[0].mxu0 %v717
        %v980 = vpop.f32.mrb[0].mxu0
        %v981 = vadd.f32 0.0, %v980
        %v982 = vpop.f32.mrb[0].mxu0
        %v983 = vpop.f32.mrb[0].mxu0
        %v984 = vadd.f32 0.0, %v983
        %v985 = vpop.f32.mrb[0].mxu0
        %986 = vmatprep.mubr.bf16.mxu0 0
        %987 = vmatmul.mubr.bf16.gmra.mrb[0].mxu0 %v720
        %v988 = vpop.f32.mrb[0].mxu0
        %v989 = vadd.f32 0.0, %v988
        %v990 = vpop.f32.mrb[0].mxu0
        %v991 = vpop.f32.mrb[0].mxu0
        %v992 = vadd.f32 0.0, %v991
        %v993 = vpop.f32.mrb[0].mxu0
        %994 = vmatprep.mubr.bf16.mxu0 0
        %995 = vmatmul.mubr.bf16.gmra.mrb[0].mxu0 %v723
        %v996 = vpop.f32.mrb[0].mxu0
        %v997 = vadd.f32 0.0, %v996
        %v998 = vpop.f32.mrb[0].mxu0
        %v999 = vpop.f32.mrb[0].mxu0
        %v1000 = vadd.f32 0.0, %v999
        %v1001 = vpop.f32.mrb[0].mxu0
        %1002 = vmatprep.mubr.bf16.mxu0 0
        %1003 = vmatmul.mubr.bf16.gmra.mrb[0].mxu0 %v726
        %v1004 = vpop.f32.mrb[0].mxu0
        %v1005 = vadd.f32 0.0, %v1004
        %v1006 = vpop.f32.mrb[0].mxu0
        %v1007 = vpop.f32.mrb[0].mxu0
        %v1008 = vadd.f32 0.0, %v1007
        %v1009 = vpop.f32.mrb[0].mxu0
        %1010 = vmatprep.mubr.bf16.mxu0 0
        %1011 = vmatmul.mubr.bf16.gmra.mrb[0].mxu0 %v729
        %v1012 = vpop.f32.mrb[0].mxu0
        %v1013 = vadd.f32 0.0, %v1012
        %v1014 = vpop.f32.mrb[0].mxu0
        %v1015 = vpop.f32.mrb[0].mxu0
        %v1016 = vadd.f32 0.0, %v1015
        %v1017 = vpop.f32.mrb[0].mxu0
        %1018 = vmatprep.mubr.bf16.mxu0 0
        %1019 = vmatmul.mubr.bf16.gmra.mrb[0].mxu0 %v732
        %v1020 = vpop.f32.mrb[0].mxu0
        %v1021 = vadd.f32 0.0, %v1020
        %v1022 = vpop.f32.mrb[0].mxu0
        %v1023 = vpop.f32.mrb[0].mxu0
        %v1024 = vadd.f32 0.0, %v1023
        %v1025 = vpop.f32.mrb[0].mxu0
        %1026 = vdwg.mxu0
        %v1027 = vadd.f32 %v385, %v773
        %v1028 = vadd.f32 %v386, %v776
        %v1029 = vadd.f32 %v387, %v781
        %v1030 = vadd.f32 %v388, %v784
        %v1031 = vadd.f32 %v389, %v789
        %v1032 = vadd.f32 %v390, %v792
        %v1033 = vadd.f32 %v391, %v797
        %v1034 = vadd.f32 %v392, %v800
        %v1035 = vadd.f32 %v393, %v805
        %v1036 = vadd.f32 %v394, %v808
        %v1037 = vadd.f32 %v395, %v813
        %v1038 = vadd.f32 %v396, %v816
        %v1039 = vadd.f32 %v397, %v821
        %v1040 = vadd.f32 %v398, %v824
        %v1041 = vadd.f32 %v399, %v829
        %v1042 = vadd.f32 %v400, %v832
        %v1043 = vadd.f32 %v401, %v837
        %v1044 = vadd.f32 %v402, %v840
        %v1045 = vadd.f32 %v403, %v845
        %v1046 = vadd.f32 %v404, %v848
        %v1047 = vadd.f32 %v405, %v853
        %v1048 = vadd.f32 %v406, %v856
        %v1049 = vadd.f32 %v407, %v861
        %v1050 = vadd.f32 %v408, %v864
        %v1051 = vadd.f32 %v409, %v869
        %v1052 = vadd.f32 %v410, %v872
        %v1053 = vadd.f32 %v411, %v877
        %v1054 = vadd.f32 %v412, %v880
        %v1055 = vadd.f32 %v413, %v885
        %v1056 = vadd.f32 %v414, %v888
        %v1057 = vadd.f32 %v415, %v893
        %v1058 = vadd.f32 %v416, %v896
        %v1059 = vadd.f32 %v417, %v901
        %v1060 = vadd.f32 %v418, %v904
        %v1061 = vadd.f32 %v419, %v909
        %v1062 = vadd.f32 %v420, %v912
        %v1063 = vadd.f32 %v421, %v917
        %v1064 = vadd.f32 %v422, %v920
        %v1065 = vadd.f32 %v423, %v925
        %v1066 = vadd.f32 %v424, %v928
        %v1067 = vadd.f32 %v425, %v933
        %v1068 = vadd.f32 %v426, %v936
        %v1069 = vadd.f32 %v427, %v941
        %v1070 = vadd.f32 %v428, %v944
        %v1071 = vadd.f32 %v429, %v949
        %v1072 = vadd.f32 %v430, %v952
        %v1073 = vadd.f32 %v431, %v957
        %v1074 = vadd.f32 %v432, %v960
        %v1075 = vadd.f32 %v433, %v965
        %v1076 = vadd.f32 %v434, %v968
        %v1077 = vadd.f32 %v435, %v973
        %v1078 = vadd.f32 %v436, %v976
        %v1079 = vadd.f32 %v437, %v981
        %v1080 = vadd.f32 %v438, %v984
        %v1081 = vadd.f32 %v439, %v989
        %v1082 = vadd.f32 %v440, %v992
        %v1083 = vadd.f32 %v441, %v997
        %v1084 = vadd.f32 %v442, %v1000
        %v1085 = vadd.f32 %v443, %v1005
        %v1086 = vadd.f32 %v444, %v1008
        %v1087 = vadd.f32 %v445, %v1013
        %v1088 = vadd.f32 %v446, %v1016
        %v1089 = vadd.f32 %v447, %v1021
        %v1090 = vadd.f32 %v448, %v1024
        %vm1091 = vcmask 261120
        %1092 = vst.msk [vmem:[#allocation2] sm:$0xff] %vm1091, %v1027
        %1093 = vst.msk [vmem:[#allocation2 + $0x8] sm:$0xff] %vm1091, %v1028
        %1094 = vst.msk [vmem:[#allocation2 + $0x10] sm:$0xff] %vm1091, %v1029
        %1095 = vst.msk [vmem:[#allocation2 + $0x18] sm:$0xff] %vm1091, %v1030
        %1096 = vst.msk [vmem:[#allocation2 + $0x20] sm:$0xff] %vm1091, %v1031
        %1097 = vst.msk [vmem:[#allocation2 + $0x28] sm:$0xff] %vm1091, %v1032
        %1098 = vst.msk [vmem:[#allocation2 + $0x30] sm:$0xff] %vm1091, %v1033
        %1099 = vst.msk [vmem:[#allocation2 + $0x38] sm:$0xff] %vm1091, %v1034
        %1100 = vst.msk [vmem:[#allocation2 + $0x40] sm:$0xff] %vm1091, %v1035
        %1101 = vst.msk [vmem:[#allocation2 + $0x48] sm:$0xff] %vm1091, %v1036
        %1102 = vst.msk [vmem:[#allocation2 + $0x50] sm:$0xff] %vm1091, %v1037
        %1103 = vst.msk [vmem:[#allocation2 + $0x58] sm:$0xff] %vm1091, %v1038
        %1104 = vst.msk [vmem:[#allocation2 + $0x60] sm:$0xff] %vm1091, %v1039
        %1105 = vst.msk [vmem:[#allocation2 + $0x68] sm:$0xff] %vm1091, %v1040
        %1106 = vst.msk [vmem:[#allocation2 + $0x70] sm:$0xff] %vm1091, %v1041
        %1107 = vst.msk [vmem:[#allocation2 + $0x78] sm:$0xff] %vm1091, %v1042
        %1108 = vst.msk [vmem:[#allocation2 + $0x80] sm:$0xff] %vm1091, %v1043
        %1109 = vst.msk [vmem:[#allocation2 + $0x88] sm:$0xff] %vm1091, %v1044
        %1110 = vst.msk [vmem:[#allocation2 + $0x90] sm:$0xff] %vm1091, %v1045
        %1111 = vst.msk [vmem:[#allocation2 + $0x98] sm:$0xff] %vm1091, %v1046
        %1112 = vst.msk [vmem:[#allocation2 + $0xa0] sm:$0xff] %vm1091, %v1047
        %1113 = vst.msk [vmem:[#allocation2 + $0xa8] sm:$0xff] %vm1091, %v1048
        %1114 = vst.msk [vmem:[#allocation2 + $0xb0] sm:$0xff] %vm1091, %v1049
        %1115 = vst.msk [vmem:[#allocation2 + $0xb8] sm:$0xff] %vm1091, %v1050
        %1116 = vst.msk [vmem:[#allocation2 + $0xc0] sm:$0xff] %vm1091, %v1051
        %1117 = vst.msk [vmem:[#allocation2 + $0xc8] sm:$0xff] %vm1091, %v1052
        %1118 = vst.msk [vmem:[#allocation2 + $0xd0] sm:$0xff] %vm1091, %v1053
        %1119 = vst.msk [vmem:[#allocation2 + $0xd8] sm:$0xff] %vm1091, %v1054
        %1120 = vst.msk [vmem:[#allocation2 + $0xe0] sm:$0xff] %vm1091, %v1055
        %1121 = vst.msk [vmem:[#allocation2 + $0xe8] sm:$0xff] %vm1091, %v1056
        %1122 = vst.msk [vmem:[#allocation2 + $0xf0] sm:$0xff] %vm1091, %v1057
        %1123 = vst.msk [vmem:[#allocation2 + $0xf8] sm:$0xff] %vm1091, %v1058
        %1124 = vst.msk [vmem:[#allocation2 + $0x100] sm:$0xff] %vm1091, %v1059
        %1125 = vst.msk [vmem:[#allocation2 + $0x108] sm:$0xff] %vm1091, %v1060
        %1126 = vst.msk [vmem:[#allocation2 + $0x110] sm:$0xff] %vm1091, %v1061
        %1127 = vst.msk [vmem:[#allocation2 + $0x118] sm:$0xff] %vm1091, %v1062
        %1128 = vst.msk [vmem:[#allocation2 + $0x120] sm:$0xff] %vm1091, %v1063
        %1129 = vst.msk [vmem:[#allocation2 + $0x128] sm:$0xff] %vm1091, %v1064
        %1130 = vst.msk [vmem:[#allocation2 + $0x130] sm:$0xff] %vm1091, %v1065
        %1131 = vst.msk [vmem:[#allocation2 + $0x138] sm:$0xff] %vm1091, %v1066
        %1132 = vst.msk [vmem:[#allocation2 + $0x140] sm:$0xff] %vm1091, %v1067
        %1133 = vst.msk [vmem:[#allocation2 + $0x148] sm:$0xff] %vm1091, %v1068
        %1134 = vst.msk [vmem:[#allocation2 + $0x150] sm:$0xff] %vm1091, %v1069
        %1135 = vst.msk [vmem:[#allocation2 + $0x158] sm:$0xff] %vm1091, %v1070
        %1136 = vst.msk [vmem:[#allocation2 + $0x160] sm:$0xff] %vm1091, %v1071
        %1137 = vst.msk [vmem:[#allocation2 + $0x168] sm:$0xff] %vm1091, %v1072
        %1138 = vst.msk [vmem:[#allocation2 + $0x170] sm:$0xff] %vm1091, %v1073
        %1139 = vst.msk [vmem:[#allocation2 + $0x178] sm:$0xff] %vm1091, %v1074
        %1140 = vst.msk [vmem:[#allocation2 + $0x180] sm:$0xff] %vm1091, %v1075
        %1141 = vst.msk [vmem:[#allocation2 + $0x188] sm:$0xff] %vm1091, %v1076
        %1142 = vst.msk [vmem:[#allocation2 + $0x190] sm:$0xff] %vm1091, %v1077
        %1143 = vst.msk [vmem:[#allocation2 + $0x198] sm:$0xff] %vm1091, %v1078
        %1144 = vst.msk [vmem:[#allocation2 + $0x1a0] sm:$0xff] %vm1091, %v1079
        %1145 = vst.msk [vmem:[#allocation2 + $0x1a8] sm:$0xff] %vm1091, %v1080
        %1146 = vst.msk [vmem:[#allocation2 + $0x1b0] sm:$0xff] %vm1091, %v1081
        %1147 = vst.msk [vmem:[#allocation2 + $0x1b8] sm:$0xff] %vm1091, %v1082
        %1148 = vst.msk [vmem:[#allocation2 + $0x1c0] sm:$0xff] %vm1091, %v1083
        %1149 = vst.msk [vmem:[#allocation2 + $0x1c8] sm:$0xff] %vm1091, %v1084
        %1150 = vst.msk [vmem:[#allocation2 + $0x1d0] sm:$0xff] %vm1091, %v1085
        %1151 = vst.msk [vmem:[#allocation2 + $0x1d8] sm:$0xff] %vm1091, %v1086
        %1152 = vst.msk [vmem:[#allocation2 + $0x1e0] sm:$0xff] %vm1091, %v1087
        %1153 = vst.msk [vmem:[#allocation2 + $0x1e8] sm:$0xff] %vm1091, %v1088
        %1154 = vst.msk [vmem:[#allocation2 + $0x1f0] sm:$0xff] %vm1091, %v1089
        %1155 = vst.msk [vmem:[#allocation2 + $0x1f8] sm:$0xff] %vm1091, %v1090
        // Predicated region
        $region33: #{tpu_custom_call.1} parent=27 // pred_check
          %p1156 = pneg %p252
        $region34: #{tpu_custom_call.1} parent=27 // pred_check_branch
          %1158 = sbr.rel (%p1156) target = $region36
        $region35: #{tpu_custom_call.1} parent=27 // pred_region
          %v1159 = vld [vmem:[#allocation2] sm:$0xff]
          %v1160 = vld [vmem:[#allocation2 + $0x8] sm:$0xff]
          %v1161 = vld [vmem:[#allocation2 + $0x10] sm:$0xff]
          %v1162 = vld [vmem:[#allocation2 + $0x18] sm:$0xff]
          %v1163 = vld [vmem:[#allocation2 + $0x20] sm:$0xff]
          %v1164 = vld [vmem:[#allocation2 + $0x28] sm:$0xff]
          %v1165 = vld [vmem:[#allocation2 + $0x30] sm:$0xff]
          %v1166 = vld [vmem:[#allocation2 + $0x38] sm:$0xff]
          %v1167 = vld [vmem:[#allocation2 + $0x40] sm:$0xff]
          %v1168 = vld [vmem:[#allocation2 + $0x48] sm:$0xff]
          %v1169 = vld [vmem:[#allocation2 + $0x50] sm:$0xff]
          %v1170 = vld [vmem:[#allocation2 + $0x58] sm:$0xff]
          %v1171 = vld [vmem:[#allocation2 + $0x60] sm:$0xff]
          %v1172 = vld [vmem:[#allocation2 + $0x68] sm:$0xff]
          %v1173 = vld [vmem:[#allocation2 + $0x70] sm:$0xff]
          %v1174 = vld [vmem:[#allocation2 + $0x78] sm:$0xff]
          %v1175 = vld [vmem:[#allocation2 + $0x80] sm:$0xff]
          %v1176 = vld [vmem:[#allocation2 + $0x88] sm:$0xff]
          %v1177 = vld [vmem:[#allocation2 + $0x90] sm:$0xff]
          %v1178 = vld [vmem:[#allocation2 + $0x98] sm:$0xff]
          %v1179 = vld [vmem:[#allocation2 + $0xa0] sm:$0xff]
          %v1180 = vld [vmem:[#allocation2 + $0xa8] sm:$0xff]
          %v1181 = vld [vmem:[#allocation2 + $0xb0] sm:$0xff]
          %v1182 = vld [vmem:[#allocation2 + $0xb8] sm:$0xff]
          %v1183 = vld [vmem:[#allocation2 + $0xc0] sm:$0xff]
          %v1184 = vld [vmem:[#allocation2 + $0xc8] sm:$0xff]
          %v1185 = vld [vmem:[#allocation2 + $0xd0] sm:$0xff]
          %v1186 = vld [vmem:[#allocation2 + $0xd8] sm:$0xff]
          %v1187 = vld [vmem:[#allocation2 + $0xe0] sm:$0xff]
          %v1188 = vld [vmem:[#allocation2 + $0xe8] sm:$0xff]
          %v1189 = vld [vmem:[#allocation2 + $0xf0] sm:$0xff]
          %v1190 = vld [vmem:[#allocation2 + $0xf8] sm:$0xff]
          %v1191 = vld [vmem:[#allocation2 + $0x100] sm:$0xff]
          %v1192 = vld [vmem:[#allocation2 + $0x108] sm:$0xff]
          %v1193 = vld [vmem:[#allocation2 + $0x110] sm:$0xff]
          %v1194 = vld [vmem:[#allocation2 + $0x118] sm:$0xff]
          %v1195 = vld [vmem:[#allocation2 + $0x120] sm:$0xff]
          %v1196 = vld [vmem:[#allocation2 + $0x128] sm:$0xff]
          %v1197 = vld [vmem:[#allocation2 + $0x130] sm:$0xff]
          %v1198 = vld [vmem:[#allocation2 + $0x138] sm:$0xff]
          %v1199 = vld [vmem:[#allocation2 + $0x140] sm:$0xff]
          %v1200 = vld [vmem:[#allocation2 + $0x148] sm:$0xff]
          %v1201 = vld [vmem:[#allocation2 + $0x150] sm:$0xff]
          %v1202 = vld [vmem:[#allocation2 + $0x158] sm:$0xff]
          %v1203 = vld [vmem:[#allocation2 + $0x160] sm:$0xff]
          %v1204 = vld [vmem:[#allocation2 + $0x168] sm:$0xff]
          %v1205 = vld [vmem:[#allocation2 + $0x170] sm:$0xff]
          %v1206 = vld [vmem:[#allocation2 + $0x178] sm:$0xff]
          %v1207 = vld [vmem:[#allocation2 + $0x180] sm:$0xff]
          %v1208 = vld [vmem:[#allocation2 + $0x188] sm:$0xff]
          %v1209 = vld [vmem:[#allocation2 + $0x190] sm:$0xff]
          %v1210 = vld [vmem:[#allocation2 + $0x198] sm:$0xff]
          %v1211 = vld [vmem:[#allocation2 + $0x1a0] sm:$0xff]
          %v1212 = vld [vmem:[#allocation2 + $0x1a8] sm:$0xff]
          %v1213 = vld [vmem:[#allocation2 + $0x1b0] sm:$0xff]
          %v1214 = vld [vmem:[#allocation2 + $0x1b8] sm:$0xff]
          %v1215 = vld [vmem:[#allocation2 + $0x1c0] sm:$0xff]
          %v1216 = vld [vmem:[#allocation2 + $0x1c8] sm:$0xff]
          %v1217 = vld [vmem:[#allocation2 + $0x1d0] sm:$0xff]
          %v1218 = vld [vmem:[#allocation2 + $0x1d8] sm:$0xff]
          %v1219 = vld [vmem:[#allocation2 + $0x1e0] sm:$0xff]
          %v1220 = vld [vmem:[#allocation2 + $0x1e8] sm:$0xff]
          %v1221 = vld [vmem:[#allocation2 + $0x1f0] sm:$0xff]
          %v1222 = vld [vmem:[#allocation2 + $0x1f8] sm:$0xff]
          %v1223 = vmax.f32 %v1159, 0.0
          %v1224 = vmax.f32 %v1160, 0.0
          %v1225 = vmax.f32 %v1161, 0.0
          %v1226 = vmax.f32 %v1162, 0.0
          %v1227 = vmax.f32 %v1163, 0.0
          %v1228 = vmax.f32 %v1164, 0.0
          %v1229 = vmax.f32 %v1165, 0.0
          %v1230 = vmax.f32 %v1166, 0.0
          %v1231 = vmax.f32 %v1167, 0.0
          %v1232 = vmax.f32 %v1168, 0.0
          %v1233 = vmax.f32 %v1169, 0.0
          %v1234 = vmax.f32 %v1170, 0.0
          %v1235 = vmax.f32 %v1171, 0.0
          %v1236 = vmax.f32 %v1172, 0.0
          %v1237 = vmax.f32 %v1173, 0.0
          %v1238 = vmax.f32 %v1174, 0.0
          %v1239 = vmax.f32 %v1175, 0.0
          %v1240 = vmax.f32 %v1176, 0.0
          %v1241 = vmax.f32 %v1177, 0.0
          %v1242 = vmax.f32 %v1178, 0.0
          %v1243 = vmax.f32 %v1179, 0.0
          %v1244 = vmax.f32 %v1180, 0.0
          %v1245 = vmax.f32 %v1181, 0.0
          %v1246 = vmax.f32 %v1182, 0.0
          %v1247 = vmax.f32 %v1183, 0.0
          %v1248 = vmax.f32 %v1184, 0.0
          %v1249 = vmax.f32 %v1185, 0.0
          %v1250 = vmax.f32 %v1186, 0.0
          %v1251 = vmax.f32 %v1187, 0.0
          %v1252 = vmax.f32 %v1188, 0.0
          %v1253 = vmax.f32 %v1189, 0.0
          %v1254 = vmax.f32 %v1190, 0.0
          %v1255 = vmax.f32 %v1191, 0.0
          %v1256 = vmax.f32 %v1192, 0.0
          %v1257 = vmax.f32 %v1193, 0.0
          %v1258 = vmax.f32 %v1194, 0.0
          %v1259 = vmax.f32 %v1195, 0.0
          %v1260 = vmax.f32 %v1196, 0.0
          %v1261 = vmax.f32 %v1197, 0.0
          %v1262 = vmax.f32 %v1198, 0.0
          %v1263 = vmax.f32 %v1199, 0.0
          %v1264 = vmax.f32 %v1200, 0.0
          %v1265 = vmax.f32 %v1201, 0.0
          %v1266 = vmax.f32 %v1202, 0.0
          %v1267 = vmax.f32 %v1203, 0.0
          %v1268 = vmax.f32 %v1204, 0.0
          %v1269 = vmax.f32 %v1205, 0.0
          %v1270 = vmax.f32 %v1206, 0.0
          %v1271 = vmax.f32 %v1207, 0.0
          %v1272 = vmax.f32 %v1208, 0.0
          %v1273 = vmax.f32 %v1209, 0.0
          %v1274 = vmax.f32 %v1210, 0.0
          %v1275 = vmax.f32 %v1211, 0.0
          %v1276 = vmax.f32 %v1212, 0.0
          %v1277 = vmax.f32 %v1213, 0.0
          %v1278 = vmax.f32 %v1214, 0.0
          %v1279 = vmax.f32 %v1215, 0.0
          %v1280 = vmax.f32 %v1216, 0.0
          %v1281 = vmax.f32 %v1217, 0.0
          %v1282 = vmax.f32 %v1218, 0.0
          %v1283 = vmax.f32 %v1219, 0.0
          %v1284 = vmax.f32 %v1220, 0.0
          %v1285 = vmax.f32 %v1221, 0.0
          %v1286 = vmax.f32 %v1222, 0.0
          %v1287 = vpack.c.bf16 %v1224, %v1223
          %v1288 = vpack.c.bf16 %v1226, %v1225
          %v1289 = vpack.c.bf16 %v1228, %v1227
          %v1290 = vpack.c.bf16 %v1230, %v1229
          %v1291 = vpack.c.bf16 %v1232, %v1231
          %v1292 = vpack.c.bf16 %v1234, %v1233
          %v1293 = vpack.c.bf16 %v1236, %v1235
          %v1294 = vpack.c.bf16 %v1238, %v1237
          %v1295 = vpack.c.bf16 %v1240, %v1239
          %v1296 = vpack.c.bf16 %v1242, %v1241
          %v1297 = vpack.c.bf16 %v1244, %v1243
          %v1298 = vpack.c.bf16 %v1246, %v1245
          %v1299 = vpack.c.bf16 %v1248, %v1247
          %v1300 = vpack.c.bf16 %v1250, %v1249
          %v1301 = vpack.c.bf16 %v1252, %v1251
          %v1302 = vpack.c.bf16 %v1254, %v1253
          %v1303 = vpack.c.bf16 %v1256, %v1255
          %v1304 = vpack.c.bf16 %v1258, %v1257
          %v1305 = vpack.c.bf16 %v1260, %v1259
          %v1306 = vpack.c.bf16 %v1262, %v1261
          %v1307 = vpack.c.bf16 %v1264, %v1263
          %v1308 = vpack.c.bf16 %v1266, %v1265
          %v1309 = vpack.c.bf16 %v1268, %v1267
          %v1310 = vpack.c.bf16 %v1270, %v1269
          %v1311 = vpack.c.bf16 %v1272, %v1271
          %v1312 = vpack.c.bf16 %v1274, %v1273
          %v1313 = vpack.c.bf16 %v1276, %v1275
          %v1314 = vpack.c.bf16 %v1278, %v1277
          %v1315 = vpack.c.bf16 %v1280, %v1279
          %v1316 = vpack.c.bf16 %v1282, %v1281
          %v1317 = vpack.c.bf16 %v1284, %v1283
          %v1318 = vpack.c.bf16 %v1286, %v1285
          %v1351 = vunpack.c.l.b16 %v1287
          %v1352 = vunpack.c.h.b16 %v1287
          %v1353 = vunpack.c.l.b16 %v1288
          %v1354 = vunpack.c.h.b16 %v1288
          %v1355 = vunpack.c.l.b16 %v1289
          %v1356 = vunpack.c.h.b16 %v1289
          %v1357 = vunpack.c.l.b16 %v1290
          %v1358 = vunpack.c.h.b16 %v1290
          %v1359 = vunpack.c.l.b16 %v1291
          %v1360 = vunpack.c.h.b16 %v1291
          %v1361 = vunpack.c.l.b16 %v1292
          %v1362 = vunpack.c.h.b16 %v1292
          %v1363 = vunpack.c.l.b16 %v1293
          %v1364 = vunpack.c.h.b16 %v1293
          %v1365 = vunpack.c.l.b16 %v1294
          %v1366 = vunpack.c.h.b16 %v1294
          %v1367 = vunpack.c.l.b16 %v1295
          %v1368 = vunpack.c.h.b16 %v1295
          %v1369 = vunpack.c.l.b16 %v1296
          %v1370 = vunpack.c.h.b16 %v1296
          %v1371 = vunpack.c.l.b16 %v1297
          %v1372 = vunpack.c.h.b16 %v1297
          %v1373 = vunpack.c.l.b16 %v1298
          %v1374 = vunpack.c.h.b16 %v1298
          %v1375 = vunpack.c.l.b16 %v1299
          %v1376 = vunpack.c.h.b16 %v1299
          %v1377 = vunpack.c.l.b16 %v1300
          %v1378 = vunpack.c.h.b16 %v1300
          %v1379 = vunpack.c.l.b16 %v1301
          %v1380 = vunpack.c.h.b16 %v1301
          %v1381 = vunpack.c.l.b16 %v1302
          %v1382 = vunpack.c.h.b16 %v1302
          %v1383 = vunpack.c.l.b16 %v1303
          %v1384 = vunpack.c.h.b16 %v1303
          %v1385 = vunpack.c.l.b16 %v1304
          %v1386 = vunpack.c.h.b16 %v1304
          %v1387 = vunpack.c.l.b16 %v1305
          %v1388 = vunpack.c.h.b16 %v1305
          %v1389 = vunpack.c.l.b16 %v1306
          %v1390 = vunpack.c.h.b16 %v1306
          %v1391 = vunpack.c.l.b16 %v1307
          %v1392 = vunpack.c.h.b16 %v1307
          %v1393 = vunpack.c.l.b16 %v1308
          %v1394 = vunpack.c.h.b16 %v1308
          %v1395 = vunpack.c.l.b16 %v1309
          %v1396 = vunpack.c.h.b16 %v1309
          %v1397 = vunpack.c.l.b16 %v1310
          %v1398 = vunpack.c.h.b16 %v1310
          %v1399 = vunpack.c.l.b16 %v1311
          %v1400 = vunpack.c.h.b16 %v1311
          %v1401 = vunpack.c.l.b16 %v1312
          %v1402 = vunpack.c.h.b16 %v1312
          %v1403 = vunpack.c.l.b16 %v1313
          %v1404 = vunpack.c.h.b16 %v1313
          %v1405 = vunpack.c.l.b16 %v1314
          %v1406 = vunpack.c.h.b16 %v1314
          %v1407 = vunpack.c.l.b16 %v1315
          %v1408 = vunpack.c.h.b16 %v1315
          %v1409 = vunpack.c.l.b16 %v1316
          %v1410 = vunpack.c.h.b16 %v1316
          %v1411 = vunpack.c.l.b16 %v1317
          %v1412 = vunpack.c.h.b16 %v1317
          %v1413 = vunpack.c.l.b16 %v1318
          %v1414 = vunpack.c.h.b16 %v1318
          %v1415 = vpack.c.b16 %v1351, %v1351
          %v1416 = vpack.c.b16 %v1352, %v1352
          %v1417 = vpack.c.b16 %v1353, %v1353
          %v1418 = vpack.c.b16 %v1354, %v1354
          %v1419 = vpack.c.b16 %v1355, %v1355
          %v1420 = vpack.c.b16 %v1356, %v1356
          %v1421 = vpack.c.b16 %v1357, %v1357
          %v1422 = vpack.c.b16 %v1358, %v1358
          %v1423 = vpack.c.b16 %v1359, %v1359
          %v1424 = vpack.c.b16 %v1360, %v1360
          %v1425 = vpack.c.b16 %v1361, %v1361
          %v1426 = vpack.c.b16 %v1362, %v1362
          %v1427 = vpack.c.b16 %v1363, %v1363
          %v1428 = vpack.c.b16 %v1364, %v1364
          %v1429 = vpack.c.b16 %v1365, %v1365
          %v1430 = vpack.c.b16 %v1366, %v1366
          %v1431 = vpack.c.b16 %v1367, %v1367
          %v1432 = vpack.c.b16 %v1368, %v1368
          %v1433 = vpack.c.b16 %v1369, %v1369
          %v1434 = vpack.c.b16 %v1370, %v1370
          %v1435 = vpack.c.b16 %v1371, %v1371
          %v1436 = vpack.c.b16 %v1372, %v1372
          %v1437 = vpack.c.b16 %v1373, %v1373
          %v1438 = vpack.c.b16 %v1374, %v1374
          %v1439 = vpack.c.b16 %v1375, %v1375
          %v1440 = vpack.c.b16 %v1376, %v1376
          %v1441 = vpack.c.b16 %v1377, %v1377
          %v1442 = vpack.c.b16 %v1378, %v1378
          %v1443 = vpack.c.b16 %v1379, %v1379
          %v1444 = vpack.c.b16 %v1380, %v1380
          %v1445 = vpack.c.b16 %v1381, %v1381
          %v1446 = vpack.c.b16 %v1382, %v1382
          %v1447 = vpack.c.b16 %v1383, %v1383
          %v1448 = vpack.c.b16 %v1384, %v1384
          %v1449 = vpack.c.b16 %v1385, %v1385
          %v1450 = vpack.c.b16 %v1386, %v1386
          %v1451 = vpack.c.b16 %v1387, %v1387
          %v1452 = vpack.c.b16 %v1388, %v1388
          %v1453 = vpack.c.b16 %v1389, %v1389
          %v1454 = vpack.c.b16 %v1390, %v1390
          %v1455 = vpack.c.b16 %v1391, %v1391
          %v1456 = vpack.c.b16 %v1392, %v1392
          %v1457 = vpack.c.b16 %v1393, %v1393
          %v1458 = vpack.c.b16 %v1394, %v1394
          %v1459 = vpack.c.b16 %v1395, %v1395
          %v1460 = vpack.c.b16 %v1396, %v1396
          %v1461 = vpack.c.b16 %v1397, %v1397
          %v1462 = vpack.c.b16 %v1398, %v1398
          %v1463 = vpack.c.b16 %v1399, %v1399
          %v1464 = vpack.c.b16 %v1400, %v1400
          %v1465 = vpack.c.b16 %v1401, %v1401
          %v1466 = vpack.c.b16 %v1402, %v1402
          %v1467 = vpack.c.b16 %v1403, %v1403
          %v1468 = vpack.c.b16 %v1404, %v1404
          %v1469 = vpack.c.b16 %v1405, %v1405
          %v1470 = vpack.c.b16 %v1406, %v1406
          %v1471 = vpack.c.b16 %v1407, %v1407
          %v1472 = vpack.c.b16 %v1408, %v1408
          %v1473 = vpack.c.b16 %v1409, %v1409
          %v1474 = vpack.c.b16 %v1410, %v1410
          %v1475 = vpack.c.b16 %v1411, %v1411
          %v1476 = vpack.c.b16 %v1412, %v1412
          %v1477 = vpack.c.b16 %v1413, %v1413
          %v1478 = vpack.c.b16 %v1414, %v1414
          %vm1543 = vcmask 257024
          %1544 = vst.msk [vmem:[%s215] sm:$0xf] %vm1543, %v1415
          %1545 = vst.msk [vmem:[%s215 + $0x4] sm:$0xf] %vm1543, %v1416
          %1546 = vst.msk [vmem:[%s215 + $0x8] sm:$0xf] %vm1543, %v1417
          %1547 = vst.msk [vmem:[%s215 + $0xc] sm:$0xf] %vm1543, %v1418
          %1548 = vst.msk [vmem:[%s215 + $0x10] sm:$0xf] %vm1543, %v1419
          %1549 = vst.msk [vmem:[%s215 + $0x14] sm:$0xf] %vm1543, %v1420
          %1550 = vst.msk [vmem:[%s215 + $0x18] sm:$0xf] %vm1543, %v1421
          %1551 = vst.msk [vmem:[%s215 + $0x1c] sm:$0xf] %vm1543, %v1422
          %1552 = vst.msk [vmem:[%s215 + $0x20] sm:$0xf] %vm1543, %v1423
          %1553 = vst.msk [vmem:[%s215 + $0x24] sm:$0xf] %vm1543, %v1424
          %1554 = vst.msk [vmem:[%s215 + $0x28] sm:$0xf] %vm1543, %v1425
          %1555 = vst.msk [vmem:[%s215 + $0x2c] sm:$0xf] %vm1543, %v1426
          %1556 = vst.msk [vmem:[%s215 + $0x30] sm:$0xf] %vm1543, %v1427
          %1557 = vst.msk [vmem:[%s215 + $0x34] sm:$0xf] %vm1543, %v1428
          %1558 = vst.msk [vmem:[%s215 + $0x38] sm:$0xf] %vm1543, %v1429
          %1559 = vst.msk [vmem:[%s215 + $0x3c] sm:$0xf] %vm1543, %v1430
          %1560 = vst.msk [vmem:[%s215 + $0x40] sm:$0xf] %vm1543, %v1431
          %1561 = vst.msk [vmem:[%s215 + $0x44] sm:$0xf] %vm1543, %v1432
          %1562 = vst.msk [vmem:[%s215 + $0x48] sm:$0xf] %vm1543, %v1433
          %1563 = vst.msk [vmem:[%s215 + $0x4c] sm:$0xf] %vm1543, %v1434
          %1564 = vst.msk [vmem:[%s215 + $0x50] sm:$0xf] %vm1543, %v1435
          %1565 = vst.msk [vmem:[%s215 + $0x54] sm:$0xf] %vm1543, %v1436
          %1566 = vst.msk [vmem:[%s215 + $0x58] sm:$0xf] %vm1543, %v1437
          %1567 = vst.msk [vmem:[%s215 + $0x5c] sm:$0xf] %vm1543, %v1438
          %1568 = vst.msk [vmem:[%s215 + $0x60] sm:$0xf] %vm1543, %v1439
          %1569 = vst.msk [vmem:[%s215 + $0x64] sm:$0xf] %vm1543, %v1440
          %1570 = vst.msk [vmem:[%s215 + $0x68] sm:$0xf] %vm1543, %v1441
          %1571 = vst.msk [vmem:[%s215 + $0x6c] sm:$0xf] %vm1543, %v1442
          %1572 = vst.msk [vmem:[%s215 + $0x70] sm:$0xf] %vm1543, %v1443
          %1573 = vst.msk [vmem:[%s215 + $0x74] sm:$0xf] %vm1543, %v1444
          %1574 = vst.msk [vmem:[%s215 + $0x78] sm:$0xf] %vm1543, %v1445
          %1575 = vst.msk [vmem:[%s215 + $0x7c] sm:$0xf] %vm1543, %v1446
          %1576 = vst.msk [vmem:[%s215 + $0x80] sm:$0xf] %vm1543, %v1447
          %1577 = vst.msk [vmem:[%s215 + $0x84] sm:$0xf] %vm1543, %v1448
          %1578 = vst.msk [vmem:[%s215 + $0x88] sm:$0xf] %vm1543, %v1449
          %1579 = vst.msk [vmem:[%s215 + $0x8c] sm:$0xf] %vm1543, %v1450
          %1580 = vst.msk [vmem:[%s215 + $0x90] sm:$0xf] %vm1543, %v1451
          %1581 = vst.msk [vmem:[%s215 + $0x94] sm:$0xf] %vm1543, %v1452
          %1582 = vst.msk [vmem:[%s215 + $0x98] sm:$0xf] %vm1543, %v1453
          %1583 = vst.msk [vmem:[%s215 + $0x9c] sm:$0xf] %vm1543, %v1454
          %1584 = vst.msk [vmem:[%s215 + $0xa0] sm:$0xf] %vm1543, %v1455
          %1585 = vst.msk [vmem:[%s215 + $0xa4] sm:$0xf] %vm1543, %v1456
          %1586 = vst.msk [vmem:[%s215 + $0xa8] sm:$0xf] %vm1543, %v1457
          %1587 = vst.msk [vmem:[%s215 + $0xac] sm:$0xf] %vm1543, %v1458
          %1588 = vst.msk [vmem:[%s215 + $0xb0] sm:$0xf] %vm1543, %v1459
          %1589 = vst.msk [vmem:[%s215 + $0xb4] sm:$0xf] %vm1543, %v1460
          %1590 = vst.msk [vmem:[%s215 + $0xb8] sm:$0xf] %vm1543, %v1461
          %1591 = vst.msk [vmem:[%s215 + $0xbc] sm:$0xf] %vm1543, %v1462
          %1592 = vst.msk [vmem:[%s215 + $0xc0] sm:$0xf] %vm1543, %v1463
          %1593 = vst.msk [vmem:[%s215 + $0xc4] sm:$0xf] %vm1543, %v1464
          %1594 = vst.msk [vmem:[%s215 + $0xc8] sm:$0xf] %vm1543, %v1465
          %1595 = vst.msk [vmem:[%s215 + $0xcc] sm:$0xf] %vm1543, %v1466
          %1596 = vst.msk [vmem:[%s215 + $0xd0] sm:$0xf] %vm1543, %v1467
          %1597 = vst.msk [vmem:[%s215 + $0xd4] sm:$0xf] %vm1543, %v1468
          %1598 = vst.msk [vmem:[%s215 + $0xd8] sm:$0xf] %vm1543, %v1469
          %1599 = vst.msk [vmem:[%s215 + $0xdc] sm:$0xf] %vm1543, %v1470
          %1600 = vst.msk [vmem:[%s215 + $0xe0] sm:$0xf] %vm1543, %v1471
          %1601 = vst.msk [vmem:[%s215 + $0xe4] sm:$0xf] %vm1543, %v1472
          %1602 = vst.msk [vmem:[%s215 + $0xe8] sm:$0xf] %vm1543, %v1473
          %1603 = vst.msk [vmem:[%s215 + $0xec] sm:$0xf] %vm1543, %v1474
          %1604 = vst.msk [vmem:[%s215 + $0xf0] sm:$0xf] %vm1543, %v1475
          %1605 = vst.msk [vmem:[%s215 + $0xf4] sm:$0xf] %vm1543, %v1476
          %1606 = vst.msk [vmem:[%s215 + $0xf8] sm:$0xf] %vm1543, %v1477
          %1607 = vst.msk [vmem:[%s215 + $0xfc] sm:$0xf] %vm1543, %v1478
        $region36: #{tpu_custom_call.1} parent=27 // pred_fallthru
          _
        %s1608 = sand.u32 %s107, 1
        %s1609 = sand.u32 %s107, 1
        %s1610 = smul.addr %s1609, 256
        %s1611 = scalar_lea.vmem [#allocation3], %s1610
        // Predicated region
        $region37: #{tpu_custom_call.1} parent=27 // pred_check
          %p1612 = pneg %p117
        $region38: #{tpu_custom_call.1} parent=27 // pred_check_branch
          %1614 = sbr.rel (%p1612) target = $region40
        $region39: #{tpu_custom_call.1} parent=27 // pred_region
          %s1615 = smul.u32 64, %s19
          %s1616 = ssub.s32 800, %s1615
          %p1617 = scmp.lt.s32.totalorder %s1616, 64
          %s1618 = scalar_select %p1617, %s1616, 64
          %s1619 = smul.u32 64, %s1618
          %p1620 = scmp.ne.s32.totalorder 0, %s1619
          %s1621 = sadd.s32 %s20, %s1615
          %s1622 = smul.addr %s1621, 4
          %s1623 = scalar_lea.vmem %s2, %s1622
          // Predicated region
          $region41: #{tpu_custom_call.1} parent=39 // pred_check
            %p1624 = pneg %p1620
          $region42: #{tpu_custom_call.1} parent=39 // pred_check_branch
            %1626 = sbr.rel (%p1624) target = $region44
          $region43: #{tpu_custom_call.1} parent=39 // pred_region
            // Predicated region
            $region45: #{tpu_custom_call.1} parent=43 // pred_check
              _
            $region46: #{tpu_custom_call.1} parent=43 // pred_check_branch
              %1628 = sbr.rel target = $region48
            $region47: #{tpu_custom_call.1} parent=43 // pred_region
              // Predicated region
              $region67: #{tpu_custom_call.1} parent=47 // pred_check
                _
              $region68: #{tpu_custom_call.1} parent=47 // pred_check_branch
                %1803 = sbr.rel (0) target = $region70
              $region69: #{tpu_custom_call.1} parent=47 // pred_region
                %s1805 = sshrl.u32 %s1618, 6
                // While loop
                $region71: #{tpu_custom_call.1} parent=69 // loop_pre_header
                  _
                $region72: #{tpu_custom_call.1} parent=69 // loop_header
                  %s1807 = sphi 0, %s1809
                  %p1808 = scmp.ge.s32.totalorder %s1807, %s1805
                  %s1812 = sphi 0, %s1945
                  %s1813 = sphi %s1611, %s1948
                  %s1814 = sphi %s1623, %s1949
                $region73: #{tpu_custom_call.1} parent=69 // loop_header_branch
                  %1811 = sbr.rel (%p1808) target = $region77
                $region74: #{tpu_custom_call.1} parent=69 // loop_body
                  %v1815 = vld [vmem:[%s1813] sm:$0xf]
                  %1816 = vst [vmem:[%s1814] sm:$0xf] %v1815
                  %v1817 = vld [vmem:[%s1813 + $0x4] sm:$0xf]
                  %1818 = vst [vmem:[%s1814 + $0x4] sm:$0xf] %v1817
                  %v1819 = vld [vmem:[%s1813 + $0x8] sm:$0xf]
                  %1820 = vst [vmem:[%s1814 + $0x8] sm:$0xf] %v1819
                  %v1821 = vld [vmem:[%s1813 + $0xc] sm:$0xf]
                  %1822 = vst [vmem:[%s1814 + $0xc] sm:$0xf] %v1821
                  %v1823 = vld [vmem:[%s1813 + $0x10] sm:$0xf]
                  %1824 = vst [vmem:[%s1814 + $0x10] sm:$0xf] %v1823
                  %v1825 = vld [vmem:[%s1813 + $0x14] sm:$0xf]
                  %1826 = vst [vmem:[%s1814 + $0x14] sm:$0xf] %v1825
                  %v1827 = vld [vmem:[%s1813 + $0x18] sm:$0xf]
                  %1828 = vst [vmem:[%s1814 + $0x18] sm:$0xf] %v1827
                  %v1829 = vld [vmem:[%s1813 + $0x1c] sm:$0xf]
                  %1830 = vst [vmem:[%s1814 + $0x1c] sm:$0xf] %v1829
                  %v1831 = vld [vmem:[%s1813 + $0x20] sm:$0xf]
                  %1832 = vst [vmem:[%s1814 + $0x20] sm:$0xf] %v1831
                  %v1833 = vld [vmem:[%s1813 + $0x24] sm:$0xf]
                  %1834 = vst [vmem:[%s1814 + $0x24] sm:$0xf] %v1833
                  %v1835 = vld [vmem:[%s1813 + $0x28] sm:$0xf]
                  %1836 = vst [vmem:[%s1814 + $0x28] sm:$0xf] %v1835
                  %v1837 = vld [vmem:[%s1813 + $0x2c] sm:$0xf]
                  %1838 = vst [vmem:[%s1814 + $0x2c] sm:$0xf] %v1837
                  %v1839 = vld [vmem:[%s1813 + $0x30] sm:$0xf]
                  %1840 = vst [vmem:[%s1814 + $0x30] sm:$0xf] %v1839
                  %v1841 = vld [vmem:[%s1813 + $0x34] sm:$0xf]
                  %1842 = vst [vmem:[%s1814 + $0x34] sm:$0xf] %v1841
                  %v1843 = vld [vmem:[%s1813 + $0x38] sm:$0xf]
                  %1844 = vst [vmem:[%s1814 + $0x38] sm:$0xf] %v1843
                  %v1845 = vld [vmem:[%s1813 + $0x3c] sm:$0xf]
                  %1846 = vst [vmem:[%s1814 + $0x3c] sm:$0xf] %v1845
                  %v1847 = vld [vmem:[%s1813 + $0x40] sm:$0xf]
                  %1848 = vst [vmem:[%s1814 + $0x40] sm:$0xf] %v1847
                  %v1849 = vld [vmem:[%s1813 + $0x44] sm:$0xf]
                  %1850 = vst [vmem:[%s1814 + $0x44] sm:$0xf] %v1849
                  %v1851 = vld [vmem:[%s1813 + $0x48] sm:$0xf]
                  %1852 = vst [vmem:[%s1814 + $0x48] sm:$0xf] %v1851
                  %v1853 = vld [vmem:[%s1813 + $0x4c] sm:$0xf]
                  %1854 = vst [vmem:[%s1814 + $0x4c] sm:$0xf] %v1853
                  %v1855 = vld [vmem:[%s1813 + $0x50] sm:$0xf]
                  %1856 = vst [vmem:[%s1814 + $0x50] sm:$0xf] %v1855
                  %v1857 = vld [vmem:[%s1813 + $0x54] sm:$0xf]
                  %1858 = vst [vmem:[%s1814 + $0x54] sm:$0xf] %v1857
                  %v1859 = vld [vmem:[%s1813 + $0x58] sm:$0xf]
                  %1860 = vst [vmem:[%s1814 + $0x58] sm:$0xf] %v1859
                  %v1861 = vld [vmem:[%s1813 + $0x5c] sm:$0xf]
                  %1862 = vst [vmem:[%s1814 + $0x5c] sm:$0xf] %v1861
                  %v1863 = vld [vmem:[%s1813 + $0x60] sm:$0xf]
                  %1864 = vst [vmem:[%s1814 + $0x60] sm:$0xf] %v1863
                  %v1865 = vld [vmem:[%s1813 + $0x64] sm:$0xf]
                  %1866 = vst [vmem:[%s1814 + $0x64] sm:$0xf] %v1865
                  %v1867 = vld [vmem:[%s1813 + $0x68] sm:$0xf]
                  %1868 = vst [vmem:[%s1814 + $0x68] sm:$0xf] %v1867
                  %v1869 = vld [vmem:[%s1813 + $0x6c] sm:$0xf]
                  %1870 = vst [vmem:[%s1814 + $0x6c] sm:$0xf] %v1869
                  %v1871 = vld [vmem:[%s1813 + $0x70] sm:$0xf]
                  %1872 = vst [vmem:[%s1814 + $0x70] sm:$0xf] %v1871
                  %v1873 = vld [vmem:[%s1813 + $0x74] sm:$0xf]
                  %1874 = vst [vmem:[%s1814 + $0x74] sm:$0xf] %v1873
                  %v1875 = vld [vmem:[%s1813 + $0x78] sm:$0xf]
                  %1876 = vst [vmem:[%s1814 + $0x78] sm:$0xf] %v1875
                  %v1877 = vld [vmem:[%s1813 + $0x7c] sm:$0xf]
                  %1878 = vst [vmem:[%s1814 + $0x7c] sm:$0xf] %v1877
                  %v1879 = vld [vmem:[%s1813 + $0x80] sm:$0xf]
                  %1880 = vst [vmem:[%s1814 + $0x80] sm:$0xf] %v1879
                  %v1881 = vld [vmem:[%s1813 + $0x84] sm:$0xf]
                  %1882 = vst [vmem:[%s1814 + $0x84] sm:$0xf] %v1881
                  %v1883 = vld [vmem:[%s1813 + $0x88] sm:$0xf]
                  %1884 = vst [vmem:[%s1814 + $0x88] sm:$0xf] %v1883
                  %v1885 = vld [vmem:[%s1813 + $0x8c] sm:$0xf]
                  %1886 = vst [vmem:[%s1814 + $0x8c] sm:$0xf] %v1885
                  %v1887 = vld [vmem:[%s1813 + $0x90] sm:$0xf]
                  %1888 = vst [vmem:[%s1814 + $0x90] sm:$0xf] %v1887
                  %v1889 = vld [vmem:[%s1813 + $0x94] sm:$0xf]
                  %1890 = vst [vmem:[%s1814 + $0x94] sm:$0xf] %v1889
                  %v1891 = vld [vmem:[%s1813 + $0x98] sm:$0xf]
                  %1892 = vst [vmem:[%s1814 + $0x98] sm:$0xf] %v1891
                  %v1893 = vld [vmem:[%s1813 + $0x9c] sm:$0xf]
                  %1894 = vst [vmem:[%s1814 + $0x9c] sm:$0xf] %v1893
                  %v1895 = vld [vmem:[%s1813 + $0xa0] sm:$0xf]
                  %1896 = vst [vmem:[%s1814 + $0xa0] sm:$0xf] %v1895
                  %v1897 = vld [vmem:[%s1813 + $0xa4] sm:$0xf]
                  %1898 = vst [vmem:[%s1814 + $0xa4] sm:$0xf] %v1897
                  %v1899 = vld [vmem:[%s1813 + $0xa8] sm:$0xf]
                  %1900 = vst [vmem:[%s1814 + $0xa8] sm:$0xf] %v1899
                  %v1901 = vld [vmem:[%s1813 + $0xac] sm:$0xf]
                  %1902 = vst [vmem:[%s1814 + $0xac] sm:$0xf] %v1901
                  %v1903 = vld [vmem:[%s1813 + $0xb0] sm:$0xf]
                  %1904 = vst [vmem:[%s1814 + $0xb0] sm:$0xf] %v1903
                  %v1905 = vld [vmem:[%s1813 + $0xb4] sm:$0xf]
                  %1906 = vst [vmem:[%s1814 + $0xb4] sm:$0xf] %v1905
                  %v1907 = vld [vmem:[%s1813 + $0xb8] sm:$0xf]
                  %1908 = vst [vmem:[%s1814 + $0xb8] sm:$0xf] %v1907
                  %v1909 = vld [vmem:[%s1813 + $0xbc] sm:$0xf]
                  %1910 = vst [vmem:[%s1814 + $0xbc] sm:$0xf] %v1909
                  %v1911 = vld [vmem:[%s1813 + $0xc0] sm:$0xf]
                  %1912 = vst [vmem:[%s1814 + $0xc0] sm:$0xf] %v1911
                  %v1913 = vld [vmem:[%s1813 + $0xc4] sm:$0xf]
                  %1914 = vst [vmem:[%s1814 + $0xc4] sm:$0xf] %v1913
                  %v1915 = vld [vmem:[%s1813 + $0xc8] sm:$0xf]
                  %1916 = vst [vmem:[%s1814 + $0xc8] sm:$0xf] %v1915
                  %v1917 = vld [vmem:[%s1813 + $0xcc] sm:$0xf]
                  %1918 = vst [vmem:[%s1814 + $0xcc] sm:$0xf] %v1917
                  %v1919 = vld [vmem:[%s1813 + $0xd0] sm:$0xf]
                  %1920 = vst [vmem:[%s1814 + $0xd0] sm:$0xf] %v1919
                  %v1921 = vld [vmem:[%s1813 + $0xd4] sm:$0xf]
                  %1922 = vst [vmem:[%s1814 + $0xd4] sm:$0xf] %v1921
                  %v1923 = vld [vmem:[%s1813 + $0xd8] sm:$0xf]
                  %1924 = vst [vmem:[%s1814 + $0xd8] sm:$0xf] %v1923
                  %v1925 = vld [vmem:[%s1813 + $0xdc] sm:$0xf]
                  %1926 = vst [vmem:[%s1814 + $0xdc] sm:$0xf] %v1925
                  %v1927 = vld [vmem:[%s1813 + $0xe0] sm:$0xf]
                  %1928 = vst [vmem:[%s1814 + $0xe0] sm:$0xf] %v1927
                  %v1929 = vld [vmem:[%s1813 + $0xe4] sm:$0xf]
                  %1930 = vst [vmem:[%s1814 + $0xe4] sm:$0xf] %v1929
                  %v1931 = vld [vmem:[%s1813 + $0xe8] sm:$0xf]
                  %1932 = vst [vmem:[%s1814 + $0xe8] sm:$0xf] %v1931
                  %v1933 = vld [vmem:[%s1813 + $0xec] sm:$0xf]
                  %1934 = vst [vmem:[%s1814 + $0xec] sm:$0xf] %v1933
                  %v1935 = vld [vmem:[%s1813 + $0xf0] sm:$0xf]
                  %1936 = vst [vmem:[%s1814 + $0xf0] sm:$0xf] %v1935
                  %v1937 = vld [vmem:[%s1813 + $0xf4] sm:$0xf]
                  %1938 = vst [vmem:[%s1814 + $0xf4] sm:$0xf] %v1937
                  %v1939 = vld [vmem:[%s1813 + $0xf8] sm:$0xf]
                  %1940 = vst [vmem:[%s1814 + $0xf8] sm:$0xf] %v1939
                  %v1941 = vld [vmem:[%s1813 + $0xfc] sm:$0xf]
                  %1942 = vst [vmem:[%s1814 + $0xfc] sm:$0xf] %v1941
                  %s1943 = sadd.s32 1, %s1812
                  %p1944 = scmp.ge.s32.totalorder %s1943, %s1805
                  %s1945 = scalar_select %p1944, 0, %s1943
                  %s1946 = smul.u32 %s1945, 256
                  %s1947 = smul.u32 %s1945, 256
                  %s1948 = scalar_lea.vmem %s1611, %s1946 [#allocation3]
                  %s1949 = scalar_lea.vmem %s1623, %s1947
                $region75: #{tpu_custom_call.1} parent=69 // loop_footer
                  %s1809 = sadd.s32 %s1807, 1
                $region76: #{tpu_custom_call.1} parent=69 // loop_footer_branch
                  %1806 = sbr.rel target = $region72
                $region77: #{tpu_custom_call.1} parent=69 // loop_exit
                  _
                %s1950 = sshrl.u32 %s1618, 6
                %s1951 = sand.u32 %s1618, 63
                %s1952 = smul.u32 %s1950, 64
                %s1953 = smul.u32 4, %s1952
                %s1954 = scalar_lea.vmem %s1611, %s1953 [#allocation3]
                %s1955 = smul.u32 4, %s1952
                %s1956 = scalar_lea.vmem %s1623, %s1955
                // While loop
                $region78: #{tpu_custom_call.1} parent=69 // loop_pre_header
                  _
                $region79: #{tpu_custom_call.1} parent=69 // loop_header
                  %s1958 = sphi 0, %s1960
                  %p1959 = scmp.ge.s32.totalorder %s1958, %s1951
                  %s1963 = sphi 0, %s1970
                  %s1964 = sphi %s1954, %s1973
                  %s1965 = sphi %s1956, %s1974
                $region80: #{tpu_custom_call.1} parent=69 // loop_header_branch
                  %1962 = sbr.rel (%p1959) target = $region84
                $region81: #{tpu_custom_call.1} parent=69 // loop_body
                  %v1966 = vld [vmem:[%s1964] sm:$0xf]
                  %1967 = vst [vmem:[%s1965] sm:$0xf] %v1966
                  %s1968 = sadd.s32 1, %s1963
                  %p1969 = scmp.ge.s32.totalorder %s1968, %s1951
                  %s1970 = scalar_select %p1969, 0, %s1968
                  %s1971 = smul.u32 %s1970, 4
                  %s1972 = smul.u32 %s1970, 4
                  %s1973 = scalar_lea.vmem %s1954, %s1971 [#allocation3]
                  %s1974 = scalar_lea.vmem %s1956, %s1972
                $region82: #{tpu_custom_call.1} parent=69 // loop_footer
                  %s1960 = sadd.s32 %s1958, 1
                $region83: #{tpu_custom_call.1} parent=69 // loop_footer_branch
                  %1957 = sbr.rel target = $region79
                $region84: #{tpu_custom_call.1} parent=69 // loop_exit
                  _
              $region70: #{tpu_custom_call.1} parent=47 // pred_fallthru
                _
            $region48: #{tpu_custom_call.1} parent=43 // pred_fallthru
              _
            // Predicated region
            $region49: #{tpu_custom_call.1} parent=43 // pred_check
              _
            $region50: #{tpu_custom_call.1} parent=43 // pred_check_branch
              %1630 = sbr.rel (0) target = $region52
            $region51: #{tpu_custom_call.1} parent=43 // pred_region
              %s1632 = sshrl.u32 %s1618, 6
              // While loop
              $region53: #{tpu_custom_call.1} parent=51 // loop_pre_header
                _
              $region54: #{tpu_custom_call.1} parent=51 // loop_header
                %s1634 = sphi 0, %s1636
                %p1635 = scmp.ge.s32.totalorder %s1634, %s1632
                %s1639 = sphi 0, %s1772
                %s1640 = sphi %s1611, %s1775
                %s1641 = sphi %s1623, %s1776
              $region55: #{tpu_custom_call.1} parent=51 // loop_header_branch
                %1638 = sbr.rel (%p1635) target = $region59
              $region56: #{tpu_custom_call.1} parent=51 // loop_body
                %v1642 = vld [vmem:[%s1640] sm:$0xf]
                %1643 = vst [vmem:[%s1641] sm:$0xf] %v1642
                %v1644 = vld [vmem:[%s1640 + $0x4] sm:$0xf]
                %1645 = vst [vmem:[%s1641 + $0x4] sm:$0xf] %v1644
                %v1646 = vld [vmem:[%s1640 + $0x8] sm:$0xf]
                %1647 = vst [vmem:[%s1641 + $0x8] sm:$0xf] %v1646
                %v1648 = vld [vmem:[%s1640 + $0xc] sm:$0xf]
                %1649 = vst [vmem:[%s1641 + $0xc] sm:$0xf] %v1648
                %v1650 = vld [vmem:[%s1640 + $0x10] sm:$0xf]
                %1651 = vst [vmem:[%s1641 + $0x10] sm:$0xf] %v1650
                %v1652 = vld [vmem:[%s1640 + $0x14] sm:$0xf]
                %1653 = vst [vmem:[%s1641 + $0x14] sm:$0xf] %v1652
                %v1654 = vld [vmem:[%s1640 + $0x18] sm:$0xf]
                %1655 = vst [vmem:[%s1641 + $0x18] sm:$0xf] %v1654
                %v1656 = vld [vmem:[%s1640 + $0x1c] sm:$0xf]
                %1657 = vst [vmem:[%s1641 + $0x1c] sm:$0xf] %v1656
                %v1658 = vld [vmem:[%s1640 + $0x20] sm:$0xf]
                %1659 = vst [vmem:[%s1641 + $0x20] sm:$0xf] %v1658
                %v1660 = vld [vmem:[%s1640 + $0x24] sm:$0xf]
                %1661 = vst [vmem:[%s1641 + $0x24] sm:$0xf] %v1660
                %v1662 = vld [vmem:[%s1640 + $0x28] sm:$0xf]
                %1663 = vst [vmem:[%s1641 + $0x28] sm:$0xf] %v1662
                %v1664 = vld [vmem:[%s1640 + $0x2c] sm:$0xf]
                %1665 = vst [vmem:[%s1641 + $0x2c] sm:$0xf] %v1664
                %v1666 = vld [vmem:[%s1640 + $0x30] sm:$0xf]
                %1667 = vst [vmem:[%s1641 + $0x30] sm:$0xf] %v1666
                %v1668 = vld [vmem:[%s1640 + $0x34] sm:$0xf]
                %1669 = vst [vmem:[%s1641 + $0x34] sm:$0xf] %v1668
                %v1670 = vld [vmem:[%s1640 + $0x38] sm:$0xf]
                %1671 = vst [vmem:[%s1641 + $0x38] sm:$0xf] %v1670
                %v1672 = vld [vmem:[%s1640 + $0x3c] sm:$0xf]
                %1673 = vst [vmem:[%s1641 + $0x3c] sm:$0xf] %v1672
                %v1674 = vld [vmem:[%s1640 + $0x40] sm:$0xf]
                %1675 = vst [vmem:[%s1641 + $0x40] sm:$0xf] %v1674
                %v1676 = vld [vmem:[%s1640 + $0x44] sm:$0xf]
                %1677 = vst [vmem:[%s1641 + $0x44] sm:$0xf] %v1676
                %v1678 = vld [vmem:[%s1640 + $0x48] sm:$0xf]
                %1679 = vst [vmem:[%s1641 + $0x48] sm:$0xf] %v1678
                %v1680 = vld [vmem:[%s1640 + $0x4c] sm:$0xf]
                %1681 = vst [vmem:[%s1641 + $0x4c] sm:$0xf] %v1680
                %v1682 = vld [vmem:[%s1640 + $0x50] sm:$0xf]
                %1683 = vst [vmem:[%s1641 + $0x50] sm:$0xf] %v1682
                %v1684 = vld [vmem:[%s1640 + $0x54] sm:$0xf]
                %1685 = vst [vmem:[%s1641 + $0x54] sm:$0xf] %v1684
                %v1686 = vld [vmem:[%s1640 + $0x58] sm:$0xf]
                %1687 = vst [vmem:[%s1641 + $0x58] sm:$0xf] %v1686
                %v1688 = vld [vmem:[%s1640 + $0x5c] sm:$0xf]
                %1689 = vst [vmem:[%s1641 + $0x5c] sm:$0xf] %v1688
                %v1690 = vld [vmem:[%s1640 + $0x60] sm:$0xf]
                %1691 = vst [vmem:[%s1641 + $0x60] sm:$0xf] %v1690
                %v1692 = vld [vmem:[%s1640 + $0x64] sm:$0xf]
                %1693 = vst [vmem:[%s1641 + $0x64] sm:$0xf] %v1692
                %v1694 = vld [vmem:[%s1640 + $0x68] sm:$0xf]
                %1695 = vst [vmem:[%s1641 + $0x68] sm:$0xf] %v1694
                %v1696 = vld [vmem:[%s1640 + $0x6c] sm:$0xf]
                %1697 = vst [vmem:[%s1641 + $0x6c] sm:$0xf] %v1696
                %v1698 = vld [vmem:[%s1640 + $0x70] sm:$0xf]
                %1699 = vst [vmem:[%s1641 + $0x70] sm:$0xf] %v1698
                %v1700 = vld [vmem:[%s1640 + $0x74] sm:$0xf]
                %1701 = vst [vmem:[%s1641 + $0x74] sm:$0xf] %v1700
                %v1702 = vld [vmem:[%s1640 + $0x78] sm:$0xf]
                %1703 = vst [vmem:[%s1641 + $0x78] sm:$0xf] %v1702
                %v1704 = vld [vmem:[%s1640 + $0x7c] sm:$0xf]
                %1705 = vst [vmem:[%s1641 + $0x7c] sm:$0xf] %v1704
                %v1706 = vld [vmem:[%s1640 + $0x80] sm:$0xf]
                %1707 = vst [vmem:[%s1641 + $0x80] sm:$0xf] %v1706
                %v1708 = vld [vmem:[%s1640 + $0x84] sm:$0xf]
                %1709 = vst [vmem:[%s1641 + $0x84] sm:$0xf] %v1708
                %v1710 = vld [vmem:[%s1640 + $0x88] sm:$0xf]
                %1711 = vst [vmem:[%s1641 + $0x88] sm:$0xf] %v1710
                %v1712 = vld [vmem:[%s1640 + $0x8c] sm:$0xf]
                %1713 = vst [vmem:[%s1641 + $0x8c] sm:$0xf] %v1712
                %v1714 = vld [vmem:[%s1640 + $0x90] sm:$0xf]
                %1715 = vst [vmem:[%s1641 + $0x90] sm:$0xf] %v1714
                %v1716 = vld [vmem:[%s1640 + $0x94] sm:$0xf]
                %1717 = vst [vmem:[%s1641 + $0x94] sm:$0xf] %v1716
                %v1718 = vld [vmem:[%s1640 + $0x98] sm:$0xf]
                %1719 = vst [vmem:[%s1641 + $0x98] sm:$0xf] %v1718
                %v1720 = vld [vmem:[%s1640 + $0x9c] sm:$0xf]
                %1721 = vst [vmem:[%s1641 + $0x9c] sm:$0xf] %v1720
                %v1722 = vld [vmem:[%s1640 + $0xa0] sm:$0xf]
                %1723 = vst [vmem:[%s1641 + $0xa0] sm:$0xf] %v1722
                %v1724 = vld [vmem:[%s1640 + $0xa4] sm:$0xf]
                %1725 = vst [vmem:[%s1641 + $0xa4] sm:$0xf] %v1724
                %v1726 = vld [vmem:[%s1640 + $0xa8] sm:$0xf]
                %1727 = vst [vmem:[%s1641 + $0xa8] sm:$0xf] %v1726
                %v1728 = vld [vmem:[%s1640 + $0xac] sm:$0xf]
                %1729 = vst [vmem:[%s1641 + $0xac] sm:$0xf] %v1728
                %v1730 = vld [vmem:[%s1640 + $0xb0] sm:$0xf]
                %1731 = vst [vmem:[%s1641 + $0xb0] sm:$0xf] %v1730
                %v1732 = vld [vmem:[%s1640 + $0xb4] sm:$0xf]
                %1733 = vst [vmem:[%s1641 + $0xb4] sm:$0xf] %v1732
                %v1734 = vld [vmem:[%s1640 + $0xb8] sm:$0xf]
                %1735 = vst [vmem:[%s1641 + $0xb8] sm:$0xf] %v1734
                %v1736 = vld [vmem:[%s1640 + $0xbc] sm:$0xf]
                %1737 = vst [vmem:[%s1641 + $0xbc] sm:$0xf] %v1736
                %v1738 = vld [vmem:[%s1640 + $0xc0] sm:$0xf]
                %1739 = vst [vmem:[%s1641 + $0xc0] sm:$0xf] %v1738
                %v1740 = vld [vmem:[%s1640 + $0xc4] sm:$0xf]
                %1741 = vst [vmem:[%s1641 + $0xc4] sm:$0xf] %v1740
                %v1742 = vld [vmem:[%s1640 + $0xc8] sm:$0xf]
                %1743 = vst [vmem:[%s1641 + $0xc8] sm:$0xf] %v1742
                %v1744 = vld [vmem:[%s1640 + $0xcc] sm:$0xf]
                %1745 = vst [vmem:[%s1641 + $0xcc] sm:$0xf] %v1744
                %v1746 = vld [vmem:[%s1640 + $0xd0] sm:$0xf]
                %1747 = vst [vmem:[%s1641 + $0xd0] sm:$0xf] %v1746
                %v1748 = vld [vmem:[%s1640 + $0xd4] sm:$0xf]
                %1749 = vst [vmem:[%s1641 + $0xd4] sm:$0xf] %v1748
                %v1750 = vld [vmem:[%s1640 + $0xd8] sm:$0xf]
                %1751 = vst [vmem:[%s1641 + $0xd8] sm:$0xf] %v1750
                %v1752 = vld [vmem:[%s1640 + $0xdc] sm:$0xf]
                %1753 = vst [vmem:[%s1641 + $0xdc] sm:$0xf] %v1752
                %v1754 = vld [vmem:[%s1640 + $0xe0] sm:$0xf]
                %1755 = vst [vmem:[%s1641 + $0xe0] sm:$0xf] %v1754
                %v1756 = vld [vmem:[%s1640 + $0xe4] sm:$0xf]
                %1757 = vst [vmem:[%s1641 + $0xe4] sm:$0xf] %v1756
                %v1758 = vld [vmem:[%s1640 + $0xe8] sm:$0xf]
                %1759 = vst [vmem:[%s1641 + $0xe8] sm:$0xf] %v1758
                %v1760 = vld [vmem:[%s1640 + $0xec] sm:$0xf]
                %1761 = vst [vmem:[%s1641 + $0xec] sm:$0xf] %v1760
                %v1762 = vld [vmem:[%s1640 + $0xf0] sm:$0xf]
                %1763 = vst [vmem:[%s1641 + $0xf0] sm:$0xf] %v1762
                %v1764 = vld [vmem:[%s1640 + $0xf4] sm:$0xf]
                %1765 = vst [vmem:[%s1641 + $0xf4] sm:$0xf] %v1764
                %v1766 = vld [vmem:[%s1640 + $0xf8] sm:$0xf]
                %1767 = vst [vmem:[%s1641 + $0xf8] sm:$0xf] %v1766
                %v1768 = vld [vmem:[%s1640 + $0xfc] sm:$0xf]
                %1769 = vst [vmem:[%s1641 + $0xfc] sm:$0xf] %v1768
                %s1770 = sadd.s32 1, %s1639
                %p1771 = scmp.ge.s32.totalorder %s1770, %s1632
                %s1772 = scalar_select %p1771, 0, %s1770
                %s1773 = smul.u32 %s1772, 256
                %s1774 = smul.u32 %s1772, 256
                %s1775 = scalar_lea.vmem %s1611, %s1773 [#allocation3]
                %s1776 = scalar_lea.vmem %s1623, %s1774
              $region57: #{tpu_custom_call.1} parent=51 // loop_footer
                %s1636 = sadd.s32 %s1634, 1
              $region58: #{tpu_custom_call.1} parent=51 // loop_footer_branch
                %1633 = sbr.rel target = $region54
              $region59: #{tpu_custom_call.1} parent=51 // loop_exit
                _
              %s1777 = sshrl.u32 %s1618, 6
              %s1778 = sand.u32 %s1618, 63
              %s1779 = smul.u32 %s1777, 64
              %s1780 = smul.u32 4, %s1779
              %s1781 = scalar_lea.vmem %s1611, %s1780 [#allocation3]
              %s1782 = smul.u32 4, %s1779
              %s1783 = scalar_lea.vmem %s1623, %s1782
              // While loop
              $region60: #{tpu_custom_call.1} parent=51 // loop_pre_header
                _
              $region61: #{tpu_custom_call.1} parent=51 // loop_header
                %s1785 = sphi 0, %s1787
                %p1786 = scmp.ge.s32.totalorder %s1785, %s1778
                %s1790 = sphi 0, %s1797
                %s1791 = sphi %s1781, %s1800
                %s1792 = sphi %s1783, %s1801
              $region62: #{tpu_custom_call.1} parent=51 // loop_header_branch
                %1789 = sbr.rel (%p1786) target = $region66
              $region63: #{tpu_custom_call.1} parent=51 // loop_body
                %v1793 = vld [vmem:[%s1791] sm:$0xf]
                %1794 = vst [vmem:[%s1792] sm:$0xf] %v1793
                %s1795 = sadd.s32 1, %s1790
                %p1796 = scmp.ge.s32.totalorder %s1795, %s1778
                %s1797 = scalar_select %p1796, 0, %s1795
                %s1798 = smul.u32 %s1797, 4
                %s1799 = smul.u32 %s1797, 4
                %s1800 = scalar_lea.vmem %s1781, %s1798 [#allocation3]
                %s1801 = scalar_lea.vmem %s1783, %s1799
              $region64: #{tpu_custom_call.1} parent=51 // loop_footer
                %s1787 = sadd.s32 %s1785, 1
              $region65: #{tpu_custom_call.1} parent=51 // loop_footer_branch
                %1784 = sbr.rel target = $region61
              $region66: #{tpu_custom_call.1} parent=51 // loop_exit
                _
            $region52: #{tpu_custom_call.1} parent=43 // pred_fallthru
              _
          $region44: #{tpu_custom_call.1} parent=39 // pred_fallthru
            _
          %1975 = vnop
        $region40: #{tpu_custom_call.1} parent=27 // pred_fallthru
          _
      $region28: #{tpu_custom_call.1} parent=5 // pred_fallthru
        _
      %p1976 = scmp.le.s32.totalorder 2, %s8
      // Predicated region
      $region85: #{tpu_custom_call.1} parent=5 // pred_check
        %p1977 = pneg %p1976
      $region86: #{tpu_custom_call.1} parent=5 // pred_check_branch
        %1979 = sbr.rel (%p1977) target = $region88
      $region87: #{tpu_custom_call.1} parent=5 // pred_region
        %s1980 = ssub.s32 %s8, 2
        // Predicated region
        $region89: #{tpu_custom_call.1} parent=87 // pred_check
          %p1981 = pneg %p123
        $region90: #{tpu_custom_call.1} parent=87 // pred_check_branch
          %1983 = sbr.rel (%p1981) target = $region92
        $region91: #{tpu_custom_call.1} parent=87 // pred_region
          %s1984 = sand.u32 %s108, 1
          %s1985 = sand.u32 %s108, 1
          %s1986 = smul.addr %s1985, 256
          %s1987 = scalar_lea.vmem [#allocation3], %s1986
        $region92: #{tpu_custom_call.1} parent=87 // pred_fallthru
          _
      $region88: #{tpu_custom_call.1} parent=5 // pred_fallthru
        _
    $region6: #{tpu_custom_call.1} parent=1 // loop_footer
      %s12 = sadd.s32 1, %s8
    $region7: #{tpu_custom_call.1} parent=1 // loop_footer_branch
      %7 = sbr.rel target = $region3
    $region8: #{tpu_custom_call.1} parent=1 // loop_exit
      _

</llo_original>
